<compile_context>
chip_gen: v5e
topology: v5e:2x2
jax: 0.10.0
libtpu: 0.0.40
codegen_flags: <defaults>
</compile_context>

<pallas_src>
import jax
import jax.numpy as jnp
from jax import lax
from jax.experimental import pallas as pl
from jax.experimental.pallas import tpu as pltpu


def _lstm_kernel(x_ref, wih_ref, whh_ref, b_ref, wout_ref, bout_ref,
                 out_ref, gx_scr):
    _, TB, _ = x_ref.shape
    Hp4 = wih_ref.shape[1]
    Hp = Hp4 // 4
    Bb = out_ref.shape[0]
    T = TB // Bb

    # ---- Phase 1 (non-recurrent): input projection for ALL timesteps as one
    # big MXU matmul, written to VMEM scratch. Rows are ordered (t, b).
    gx_scr[...] = (jnp.dot(x_ref[0], wih_ref[...],
                           preferred_element_type=jnp.float32)
                   + b_ref[...])                                 # (T*Bb, 4Hp)

    # ---- Phase 2: serial recurrence. Loop-invariant loads hoisted; h/c kept
    # in registers across the unrolled loop (no per-step VMEM round trip).
    whh = whh_ref[...]                                           # (Hp, 4Hp)
    h0 = jnp.zeros((Bb, Hp), jnp.float32)
    c0 = jnp.zeros((Bb, Hp), jnp.float32)

    def step(t, carry):
        h, c = carry
        row0 = pl.multiple_of(t * Bb, Bb)
        gates = (gx_scr[pl.ds(row0, Bb), :]
                 + jnp.dot(h, whh, preferred_element_type=jnp.float32))
        # Each gate occupies a full 128-lane tile (Hp multiple of 128), so
        # these slices are lane-tile aligned (no XLU relayout).
        i_g = jax.nn.sigmoid(gates[:, 0 * Hp:1 * Hp])
        f_g = jax.nn.sigmoid(gates[:, 1 * Hp:2 * Hp])
        g_g = jnp.tanh(gates[:, 2 * Hp:3 * Hp])
        o_g = jax.nn.sigmoid(gates[:, 3 * Hp:4 * Hp])
        c_new = f_g * c + i_g * g_g
        h_new = o_g * jnp.tanh(c_new)
        return h_new, c_new

    h_t, _ = lax.fori_loop(0, T, step, (h0, c0), unroll=True)

    # ---- Final linear head on the last hidden state (ht[-1]).
    out_ref[...] = (jnp.dot(h_t, wout_ref[...],
                            preferred_element_type=jnp.float32)
                    + bout_ref[...])


def _lstm_last_hidden_linear(x_blocks, wih_t, whh_t, b_gates, wout_t, b_out,
                             *, b_blk):
    """x_blocks: (n_b, T*b_blk, E) f32, rows ordered (t, b-within-block)."""
    n_b, TB, E = x_blocks.shape
    Hp4 = wih_t.shape[1]
    Hp = Hp4 // 4
    O = wout_t.shape[1]

    return pl.pallas_call(
        _lstm_kernel,
        out_shape=jax.ShapeDtypeStruct((n_b * b_blk, O), jnp.float32),
        grid_spec=pltpu.PrefetchScalarGridSpec(
            num_scalar_prefetch=0,
            grid=(n_b,),
            in_specs=[
                pl.BlockSpec((1, TB, E), lambda j: (j, 0, 0)),   # x block
                pl.BlockSpec((E, Hp4), lambda j: (0, 0)),        # W_ih^T (padded)
                pl.BlockSpec((Hp, Hp4), lambda j: (0, 0)),       # W_hh^T (padded)
                pl.BlockSpec((1, Hp4), lambda j: (0, 0)),        # b_ih + b_hh
                pl.BlockSpec((Hp, O), lambda j: (0, 0)),         # W_lin^T (padded)
                pl.BlockSpec((1, O), lambda j: (0, 0)),          # b_lin
            ],
            out_specs=pl.BlockSpec((b_blk, O), lambda j: (j, 0)),
            scratch_shapes=[pltpu.VMEM((TB, Hp4), jnp.float32)],  # gx for all t
        ),
        compiler_params=pltpu.CompilerParams(
            dimension_semantics=("parallel",)),
    )(x_blocks, wih_t, whh_t, b_gates, wout_t, b_out)


def init_params(key, vocab_size, embedding_dim, hidden_dim, output_size):
    ks = jax.random.split(key, 7)
    emb = jax.random.normal(ks[0], (vocab_size, embedding_dim), jnp.float32)
    emb = emb.at[0].set(0.0)  # padding_idx=0 row is zero
    k = 1.0 / jnp.sqrt(jnp.float32(hidden_dim))
    return {
        "emb": emb,
        "w_ih": jax.random.uniform(ks[1], (4 * hidden_dim, embedding_dim),
                                   jnp.float32, -k, k),
        "w_hh": jax.random.uniform(ks[2], (4 * hidden_dim, hidden_dim),
                                   jnp.float32, -k, k),
        "b_ih": jax.random.uniform(ks[3], (4 * hidden_dim,), jnp.float32, -k, k),
        "b_hh": jax.random.uniform(ks[4], (4 * hidden_dim,), jnp.float32, -k, k),
        "w_lin": jax.random.uniform(ks[5], (output_size, hidden_dim),
                                    jnp.float32, -k, k),
        "b_lin": jax.random.uniform(ks[6], (output_size,), jnp.float32, -k, k),
    }


def prepare_params(params):
    """One-time weight repack: pad each gate's hidden width to a multiple of
    128 lanes (Hp), pre-transpose, and fold the two biases together."""
    H = params["w_hh"].shape[1]
    O = params["w_lin"].shape[0]
    Hp = ((H + 127) // 128) * 128

    def pad_gate_rows(w):  # (4H, D) -> (4Hp, D), PyTorch gate order [i, f, g, o]
        D = w.shape[1]
        return jnp.pad(w.reshape(4, H, D),
                       ((0, 0), (0, Hp - H), (0, 0))).reshape(4 * Hp, D)

    w_ih_p = pad_gate_rows(params["w_ih"])                       # (4Hp, E)
    w_hh_p = jnp.pad(pad_gate_rows(params["w_hh"]),
                     ((0, 0), (0, Hp - H)))                      # (4Hp, Hp)
    b_p = jnp.pad((params["b_ih"] + params["b_hh"]).reshape(4, H),
                  ((0, 0), (0, Hp - H))).reshape(1, 4 * Hp)
    w_out_p = jnp.pad(params["w_lin"], ((0, 0), (0, Hp - H)))    # (O, Hp)

    return {
        "emb": params["emb"].astype(jnp.float32),
        "wih_t": jnp.asarray(w_ih_p.T, jnp.float32),             # (E, 4Hp)
        "whh_t": jnp.asarray(w_hh_p.T, jnp.float32),             # (Hp, 4Hp)
        "b": jnp.asarray(b_p, jnp.float32),                      # (1, 4Hp)
        "wout_t": jnp.asarray(w_out_p.T, jnp.float32),           # (Hp, O)
        "bout": params["b_lin"].reshape(1, -1).astype(jnp.float32),
        "H": H, "Hp": Hp, "O": O,
    }


def forward(prepped, x_ids, lengths=None):
    # `lengths` is accepted but unused — LSTM_fixed_len.forward ignores `l`.
    del lengths
    B, T = x_ids.shape
    E = prepped["emb"].shape[1]
    O = prepped["O"]

    # Pad batch to a multiple of 8 sublanes; pad rows use token 0 (zero
    # embedding row), get sliced off at the end.
    Bp = ((B + 7) // 8) * 8
    b_blk = Bp if Bp <= 128 else 128
    Bp = ((Bp + b_blk - 1) // b_blk) * b_blk
    n_b = Bp // b_blk

    ids_p = jnp.zeros((Bp, T), x_ids.dtype).at[:B].set(x_ids)
    # Gather embeddings directly in (block, time, batch-within-block) order
    # so the kernel sees a ready-to-matmul (T*b_blk, E) slab per block.
    ids_blocked = ids_p.reshape(n_b, b_blk, T).transpose(0, 2, 1)   # (n_b,T,b_blk)
    x_blocks = jnp.take(prepped["emb"], ids_blocked, axis=0)        # (n_b,T,b_blk,E)
    x_blocks = x_blocks.reshape(n_b, T * b_blk, E).astype(jnp.float32)
    # TODO(synk): nn.Dropout(0.2) is treated as inference-mode identity (no RNG mask).

    out_p = _lstm_last_hidden_linear(x_blocks, prepped["wih_t"],
                                     prepped["whh_t"], prepped["b"],
                                     prepped["wout_t"], prepped["bout"],
                                     b_blk=b_blk)                   # (Bp, O)
    return out_p[:B]


def reference(params, x_ids):
    """Pure-JAX reference: fixed-length LSTM over all T steps + linear head."""
    x_emb = jnp.take(params["emb"], x_ids, axis=0)                  # (B, T, E)
    B, T, _ = x_emb.shape
    H = params["w_hh"].shape[1]

    def step(carry, x_t):
        h, c = carry
        gates = (x_t @ params["w_ih"].T + h @ params["w_hh"].T
                 + params["b_ih"] + params["b_hh"])
        i, f, g, o = jnp.split(gates, 4, axis=-1)
        i = jax.nn.sigmoid(i)
        f = jax.nn.sigmoid(f)
        g = jnp.tanh(g)
        o = jax.nn.sigmoid(o)
        c_new = f * c + i * g
        h_new = o * jnp.tanh(c_new)
        return (h_new, c_new), None

    h0 = jnp.zeros((B, H), jnp.float32)
    c0 = jnp.zeros((B, H), jnp.float32)
    (hT, _), _ = lax.scan(step, (h0, c0), jnp.transpose(x_emb, (1, 0, 2)))
    return hT @ params["w_lin"].T + params["b_lin"]


if __name__ == "__main__":
    vocab_size, embedding_dim, hidden_dim, output_size = 50, 16, 32, 5
    B, T = 4, 8

    key = jax.random.PRNGKey(0)
    k_param, k_ids = jax.random.split(key)
    params = init_params(k_param, vocab_size, embedding_dim, hidden_dim,
                         output_size)
    prepped = prepare_params(params)

    # Token ids in [1, vocab); positions past each sequence's nominal length
    # are pad token 0 (forward itself ignores lengths, like the PyTorch module).
    x_ids = jax.random.randint(k_ids, (B, T), 1, vocab_size, dtype=jnp.int32)
    lengths = jnp.array([8, 5, 3, 6], dtype=jnp.int32)
    pad_mask = jnp.arange(T)[None, :] < lengths[:, None]
    x_ids = jnp.where(pad_mask, x_ids, 0)

    out = jax.block_until_ready(forward(prepped, x_ids, lengths))
    ref = jax.block_until_ready(reference(params, x_ids))

    assert out.shape == (B, output_size)
    assert jnp.allclose(out, ref, rtol=1e-5, atol=1e-5), (out, ref)

    print("KERNEL_OK")
</pallas_src>

<mosaic_0001>
module attributes {stable_mosaic.version = 11 : i64} {
  func.func @_lstm_kernel(%arg0: i32, %arg1: memref<1x64x16xf32, #tpu.memory_space<vmem>>, %arg2: memref<16x512xf32, #tpu.memory_space<vmem>>, %arg3: memref<128x512xf32, #tpu.memory_space<vmem>>, %arg4: memref<1x512xf32, #tpu.memory_space<vmem>>, %arg5: memref<128x5xf32, #tpu.memory_space<vmem>>, %arg6: memref<1x5xf32, #tpu.memory_space<vmem>>, %arg7: memref<8x5xf32, #tpu.memory_space<vmem>>, %arg8: memref<64x512xf32, #tpu.memory_space<vmem>>) attributes {dimension_semantics = [#tpu.dimension_semantics<parallel>], iteration_bounds = array<i64: 1>, scalar_prefetch = 0 : i64, scratch_operands = 1 : i64, tpu.core_type = #tpu.core_type<tc>, window_params = [{transform_indices = @transform_0, window_bounds = array<i64: 1, 64, 16>}, {pipeline_mode = #tpu.pipeline_mode<synchronous>, transform_indices = @transform_1, window_bounds = array<i64: 16, 512>}, {pipeline_mode = #tpu.pipeline_mode<synchronous>, transform_indices = @transform_2, window_bounds = array<i64: 128, 512>}, {pipeline_mode = #tpu.pipeline_mode<synchronous>, transform_indices = @transform_3, window_bounds = array<i64: 1, 512>}, {pipeline_mode = #tpu.pipeline_mode<synchronous>, transform_indices = @transform_4, window_bounds = array<i64: 128, 5>}, {pipeline_mode = #tpu.pipeline_mode<synchronous>, transform_indices = @transform_5, window_bounds = array<i64: 1, 5>}, {transform_indices = @transform_6, window_bounds = array<i64: 8, 5>}]} {
    %c0 = arith.constant 0 : index
    %c0_0 = arith.constant 0 : index
    %c0_1 = arith.constant 0 : index
    %0 = vector.load %arg1[%c0, %c0_0, %c0_1] : memref<1x64x16xf32, #tpu.memory_space<vmem>>, vector<1x64x16xf32>
    %1 = vector.shape_cast %0 : vector<1x64x16xf32> to vector<64x16xf32>
    %c0_2 = arith.constant 0 : index
    %c0_3 = arith.constant 0 : index
    %2 = vector.load %arg2[%c0_2, %c0_3] : memref<16x512xf32, #tpu.memory_space<vmem>>, vector<16x512xf32>
    %cst = arith.constant dense<0.000000e+00> : vector<64x512xf32>
    %3 = tpu.matmul %1, %2, %cst {dimension_numbers = #tpu.dot_dimension_numbers<[1], [0], [0], [1], [0, 0, 1, 1], [], []>} : vector<64x16xf32>, vector<16x512xf32>, vector<64x512xf32> -> vector<64x512xf32>
    %c0_4 = arith.constant 0 : index
    %c0_5 = arith.constant 0 : index
    %4 = vector.load %arg4[%c0_4, %c0_5] : memref<1x512xf32, #tpu.memory_space<vmem>>, vector<1x512xf32>
    %5 = vector.broadcast %4 : vector<1x512xf32> to vector<64x512xf32>
    %6 = arith.addf %3, %5 : vector<64x512xf32>
    %c0_6 = arith.constant 0 : index
    %c0_7 = arith.constant 0 : index
    %7 = vector.load %arg8[%c0_6, %c0_7] : memref<64x512xf32, #tpu.memory_space<vmem>>, vector<64x512xf32>
    tpu.vector_store %arg8[%c0_6, %c0_7], %6 {strides = array<i32>} : memref<64x512xf32, #tpu.memory_space<vmem>>, vector<64x512xf32>,
    %c0_8 = arith.constant 0 : index
    %c0_9 = arith.constant 0 : index
    %8 = vector.load %arg3[%c0_8, %c0_9] : memref<128x512xf32, #tpu.memory_space<vmem>>, vector<128x512xf32>
    %cst_10 = arith.constant 0.000000e+00 : f32
    %9 = vector.broadcast %cst_10 : f32 to vector<8x128xf32>
    %cst_11 = arith.constant 0.000000e+00 : f32
    %10 = vector.broadcast %cst_11 : f32 to vector<8x128xf32>
    %c0_i32 = arith.constant 0 : i32
    %c8_i32 = arith.constant 8 : i32
    %11 = arith.muli %c0_i32, %c8_i32 : i32
    %12 = tpu.assume_multiple %11, 8 : i32
    %13 = arith.index_cast %12 : i32 to index
    %c0_12 = arith.constant 0 : index
    %14 = vector.load %arg8[%13, %c0_12] : memref<64x512xf32, #tpu.memory_space<vmem>>, vector<8x512xf32>
    %cst_13 = arith.constant dense<0.000000e+00> : vector<8x512xf32>
    %15 = tpu.matmul %9, %8, %cst_13 {dimension_numbers = #tpu.dot_dimension_numbers<[1], [0], [0], [1], [0, 0, 1, 1], [], []>} : vector<8x128xf32>, vector<128x512xf32>, vector<8x512xf32> -> vector<8x512xf32>
    %16 = arith.addf %14, %15 : vector<8x512xf32>
    %17 = vector.extract_strided_slice %16 {offsets = [0, 0], sizes = [8, 128], strides = [1, 1]} : vector<8x512xf32> to vector<8x128xf32>
    %18 = arith.negf %17 : vector<8x128xf32>
    %19 = math.exp %18 : vector<8x128xf32>
    %cst_14 = arith.constant 1.000000e+00 : f32
    %20 = vector.broadcast %cst_14 : f32 to vector<8x128xf32>
    %21 = arith.addf %20, %19 : vector<8x128xf32>
    %22 = arith.divf %20, %21 : vector<8x128xf32>
    %23 = vector.extract_strided_slice %16 {offsets = [0, 128], sizes = [8, 128], strides = [1, 1]} : vector<8x512xf32> to vector<8x128xf32>
    %24 = arith.negf %23 : vector<8x128xf32>
    %25 = math.exp %24 : vector<8x128xf32>
    %cst_15 = arith.constant 1.000000e+00 : f32
    %26 = vector.broadcast %cst_15 : f32 to vector<8x128xf32>
    %27 = arith.addf %26, %25 : vector<8x128xf32>
    %28 = arith.divf %26, %27 : vector<8x128xf32>
    %29 = vector.extract_strided_slice %16 {offsets = [0, 256], sizes = [8, 128], strides = [1, 1]} : vector<8x512xf32> to vector<8x128xf32>
    %30 = math.tanh %29 : vector<8x128xf32>
    %31 = vector.extract_strided_slice %16 {offsets = [0, 384], sizes = [8, 128], strides = [1, 1]} : vector<8x512xf32> to vector<8x128xf32>
    %32 = arith.negf %31 : vector<8x128xf32>
    %33 = math.exp %32 : vector<8x128xf32>
    %cst_16 = arith.constant 1.000000e+00 : f32
    %34 = vector.broadcast %cst_16 : f32 to vector<8x128xf32>
    %35 = arith.addf %34, %33 : vector<8x128xf32>
    %36 = arith.divf %34, %35 : vector<8x128xf32>
    %37 = arith.mulf %28, %10 : vector<8x128xf32>
    %38 = arith.mulf %22, %30 : vector<8x128xf32>
    %39 = arith.addf %37, %38 : vector<8x128xf32>
    %40 = math.tanh %39 : vector<8x128xf32>
    %41 = arith.mulf %36, %40 : vector<8x128xf32>
    %c1_i32 = arith.constant 1 : i32
    %c8_i32_17 = arith.constant 8 : i32
    %42 = arith.muli %c1_i32, %c8_i32_17 : i32
    %43 = tpu.assume_multiple %42, 8 : i32
    %44 = arith.index_cast %43 : i32 to index
    %c0_18 = arith.constant 0 : index
    %45 = vector.load %arg8[%44, %c0_18] : memref<64x512xf32, #tpu.memory_space<vmem>>, vector<8x512xf32>
    %cst_19 = arith.constant dense<0.000000e+00> : vector<8x512xf32>
    %46 = tpu.matmul %41, %8, %cst_19 {dimension_numbers = #tpu.dot_dimension_numbers<[1], [0], [0], [1], [0, 0, 1, 1], [], []>} : vector<8x128xf32>, vector<128x512xf32>, vector<8x512xf32> -> vector<8x512xf32>
    %47 = arith.addf %45, %46 : vector<8x512xf32>
    %48 = vector.extract_strided_slice %47 {offsets = [0, 0], sizes = [8, 128], strides = [1, 1]} : vector<8x512xf32> to vector<8x128xf32>
    %49 = arith.negf %48 : vector<8x128xf32>
    %50 = math.exp %49 : vector<8x128xf32>
    %cst_20 = arith.constant 1.000000e+00 : f32
    %51 = vector.broadcast %cst_20 : f32 to vector<8x128xf32>
    %52 = arith.addf %51, %50 : vector<8x128xf32>
    %53 = arith.divf %51, %52 : vector<8x128xf32>
    %54 = vector.extract_strided_slice %47 {offsets = [0, 128], sizes = [8, 128], strides = [1, 1]} : vector<8x512xf32> to vector<8x128xf32>
    %55 = arith.negf %54 : vector<8x128xf32>
    %56 = math.exp %55 : vector<8x128xf32>
    %cst_21 = arith.constant 1.000000e+00 : f32
    %57 = vector.broadcast %cst_21 : f32 to vector<8x128xf32>
    %58 = arith.addf %57, %56 : vector<8x128xf32>
    %59 = arith.divf %57, %58 : vector<8x128xf32>
    %60 = vector.extract_strided_slice %47 {offsets = [0, 256], sizes = [8, 128], strides = [1, 1]} : vector<8x512xf32> to vector<8x128xf32>
    %61 = math.tanh %60 : vector<8x128xf32>
    %62 = vector.extract_strided_slice %47 {offsets = [0, 384], sizes = [8, 128], strides = [1, 1]} : vector<8x512xf32> to vector<8x128xf32>
    %63 = arith.negf %62 : vector<8x128xf32>
    %64 = math.exp %63 : vector<8x128xf32>
    %cst_22 = arith.constant 1.000000e+00 : f32
    %65 = vector.broadcast %cst_22 : f32 to vector<8x128xf32>
    %66 = arith.addf %65, %64 : vector<8x128xf32>
    %67 = arith.divf %65, %66 : vector<8x128xf32>
    %68 = arith.mulf %59, %39 : vector<8x128xf32>
    %69 = arith.mulf %53, %61 : vector<8x128xf32>
    %70 = arith.addf %68, %69 : vector<8x128xf32>
    %71 = math.tanh %70 : vector<8x128xf32>
    %72 = arith.mulf %67, %71 : vector<8x128xf32>
    %c2_i32 = arith.constant 2 : i32
    %c8_i32_23 = arith.constant 8 : i32
    %73 = arith.muli %c2_i32, %c8_i32_23 : i32
    %74 = tpu.assume_multiple %73, 8 : i32
    %75 = arith.index_cast %74 : i32 to index
    %c0_24 = arith.constant 0 : index
    %76 = vector.load %arg8[%75, %c0_24] : memref<64x512xf32, #tpu.memory_space<vmem>>, vector<8x512xf32>
    %cst_25 = arith.constant dense<0.000000e+00> : vector<8x512xf32>
    %77 = tpu.matmul %72, %8, %cst_25 {dimension_numbers = #tpu.dot_dimension_numbers<[1], [0], [0], [1], [0, 0, 1, 1], [], []>} : vector<8x128xf32>, vector<128x512xf32>, vector<8x512xf32> -> vector<8x512xf32>
    %78 = arith.addf %76, %77 : vector<8x512xf32>
    %79 = vector.extract_strided_slice %78 {offsets = [0, 0], sizes = [8, 128], strides = [1, 1]} : vector<8x512xf32> to vector<8x128xf32>
    %80 = arith.negf %79 : vector<8x128xf32>
    %81 = math.exp %80 : vector<8x128xf32>
    %cst_26 = arith.constant 1.000000e+00 : f32
    %82 = vector.broadcast %cst_26 : f32 to vector<8x128xf32>
    %83 = arith.addf %82, %81 : vector<8x128xf32>
    %84 = arith.divf %82, %83 : vector<8x128xf32>
    %85 = vector.extract_strided_slice %78 {offsets = [0, 128], sizes = [8, 128], strides = [1, 1]} : vector<8x512xf32> to vector<8x128xf32>
    %86 = arith.negf %85 : vector<8x128xf32>
    %87 = math.exp %86 : vector<8x128xf32>
    %cst_27 = arith.constant 1.000000e+00 : f32
    %88 = vector.broadcast %cst_27 : f32 to vector<8x128xf32>
    %89 = arith.addf %88, %87 : vector<8x128xf32>
    %90 = arith.divf %88, %89 : vector<8x128xf32>
    %91 = vector.extract_strided_slice %78 {offsets = [0, 256], sizes = [8, 128], strides = [1, 1]} : vector<8x512xf32> to vector<8x128xf32>
    %92 = math.tanh %91 : vector<8x128xf32>
    %93 = vector.extract_strided_slice %78 {offsets = [0, 384], sizes = [8, 128], strides = [1, 1]} : vector<8x512xf32> to vector<8x128xf32>
    %94 = arith.negf %93 : vector<8x128xf32>
    %95 = math.exp %94 : vector<8x128xf32>
    %cst_28 = arith.constant 1.000000e+00 : f32
    %96 = vector.broadcast %cst_28 : f32 to vector<8x128xf32>
    %97 = arith.addf %96, %95 : vector<8x128xf32>
    %98 = arith.divf %96, %97 : vector<8x128xf32>
    %99 = arith.mulf %90, %70 : vector<8x128xf32>
    %100 = arith.mulf %84, %92 : vector<8x128xf32>
    %101 = arith.addf %99, %100 : vector<8x128xf32>
    %102 = math.tanh %101 : vector<8x128xf32>
    %103 = arith.mulf %98, %102 : vector<8x128xf32>
    %c3_i32 = arith.constant 3 : i32
    %c8_i32_29 = arith.constant 8 : i32
    %104 = arith.muli %c3_i32, %c8_i32_29 : i32
    %105 = tpu.assume_multiple %104, 8 : i32
    %106 = arith.index_cast %105 : i32 to index
    %c0_30 = arith.constant 0 : index
    %107 = vector.load %arg8[%106, %c0_30] : memref<64x512xf32, #tpu.memory_space<vmem>>, vector<8x512xf32>
    %cst_31 = arith.constant dense<0.000000e+00> : vector<8x512xf32>
    %108 = tpu.matmul %103, %8, %cst_31 {dimension_numbers = #tpu.dot_dimension_numbers<[1], [0], [0], [1], [0, 0, 1, 1], [], []>} : vector<8x128xf32>, vector<128x512xf32>, vector<8x512xf32> -> vector<8x512xf32>
    %109 = arith.addf %107, %108 : vector<8x512xf32>
    %110 = vector.extract_strided_slice %109 {offsets = [0, 0], sizes = [8, 128], strides = [1, 1]} : vector<8x512xf32> to vector<8x128xf32>
    %111 = arith.negf %110 : vector<8x128xf32>
    %112 = math.exp %111 : vector<8x128xf32>
    %cst_32 = arith.constant 1.000000e+00 : f32
    %113 = vector.broadcast %cst_32 : f32 to vector<8x128xf32>
    %114 = arith.addf %113, %112 : vector<8x128xf32>
    %115 = arith.divf %113, %114 : vector<8x128xf32>
    %116 = vector.extract_strided_slice %109 {offsets = [0, 128], sizes = [8, 128], strides = [1, 1]} : vector<8x512xf32> to vector<8x128xf32>
    %117 = arith.negf %116 : vector<8x128xf32>
    %118 = math.exp %117 : vector<8x128xf32>
    %cst_33 = arith.constant 1.000000e+00 : f32
    %119 = vector.broadcast %cst_33 : f32 to vector<8x128xf32>
    %120 = arith.addf %119, %118 : vector<8x128xf32>
    %121 = arith.divf %119, %120 : vector<8x128xf32>
    %122 = vector.extract_strided_slice %109 {offsets = [0, 256], sizes = [8, 128], strides = [1, 1]} : vector<8x512xf32> to vector<8x128xf32>
    %123 = math.tanh %122 : vector<8x128xf32>
    %124 = vector.extract_strided_slice %109 {offsets = [0, 384], sizes = [8, 128], strides = [1, 1]} : vector<8x512xf32> to vector<8x128xf32>
    %125 = arith.negf %124 : vector<8x128xf32>
    %126 = math.exp %125 : vector<8x128xf32>
    %cst_34 = arith.constant 1.000000e+00 : f32
    %127 = vector.broadcast %cst_34 : f32 to vector<8x128xf32>
    %128 = arith.addf %127, %126 : vector<8x128xf32>
    %129 = arith.divf %127, %128 : vector<8x128xf32>
    %130 = arith.mulf %121, %101 : vector<8x128xf32>
    %131 = arith.mulf %115, %123 : vector<8x128xf32>
    %132 = arith.addf %130, %131 : vector<8x128xf32>
    %133 = math.tanh %132 : vector<8x128xf32>
    %134 = arith.mulf %129, %133 : vector<8x128xf32>
    %c4_i32 = arith.constant 4 : i32
    %c8_i32_35 = arith.constant 8 : i32
    %135 = arith.muli %c4_i32, %c8_i32_35 : i32
    %136 = tpu.assume_multiple %135, 8 : i32
    %137 = arith.index_cast %136 : i32 to index
    %c0_36 = arith.constant 0 : index
    %138 = vector.load %arg8[%137, %c0_36] : memref<64x512xf32, #tpu.memory_space<vmem>>, vector<8x512xf32>
    %cst_37 = arith.constant dense<0.000000e+00> : vector<8x512xf32>
    %139 = tpu.matmul %134, %8, %cst_37 {dimension_numbers = #tpu.dot_dimension_numbers<[1], [0], [0], [1], [0, 0, 1, 1], [], []>} : vector<8x128xf32>, vector<128x512xf32>, vector<8x512xf32> -> vector<8x512xf32>
    %140 = arith.addf %138, %139 : vector<8x512xf32>
    %141 = vector.extract_strided_slice %140 {offsets = [0, 0], sizes = [8, 128], strides = [1, 1]} : vector<8x512xf32> to vector<8x128xf32>
    %142 = arith.negf %141 : vector<8x128xf32>
    %143 = math.exp %142 : vector<8x128xf32>
    %cst_38 = arith.constant 1.000000e+00 : f32
    %144 = vector.broadcast %cst_38 : f32 to vector<8x128xf32>
    %145 = arith.addf %144, %143 : vector<8x128xf32>
    %146 = arith.divf %144, %145 : vector<8x128xf32>
    %147 = vector.extract_strided_slice %140 {offsets = [0, 128], sizes = [8, 128], strides = [1, 1]} : vector<8x512xf32> to vector<8x128xf32>
    %148 = arith.negf %147 : vector<8x128xf32>
    %149 = math.exp %148 : vector<8x128xf32>
    %cst_39 = arith.constant 1.000000e+00 : f32
    %150 = vector.broadcast %cst_39 : f32 to vector<8x128xf32>
    %151 = arith.addf %150, %149 : vector<8x128xf32>
    %152 = arith.divf %150, %151 : vector<8x128xf32>
    %153 = vector.extract_strided_slice %140 {offsets = [0, 256], sizes = [8, 128], strides = [1, 1]} : vector<8x512xf32> to vector<8x128xf32>
    %154 = math.tanh %153 : vector<8x128xf32>
    %155 = vector.extract_strided_slice %140 {offsets = [0, 384], sizes = [8, 128], strides = [1, 1]} : vector<8x512xf32> to vector<8x128xf32>
    %156 = arith.negf %155 : vector<8x128xf32>
    %157 = math.exp %156 : vector<8x128xf32>
    %cst_40 = arith.constant 1.000000e+00 : f32
    %158 = vector.broadcast %cst_40 : f32 to vector<8x128xf32>
    %159 = arith.addf %158, %157 : vector<8x128xf32>
    %160 = arith.divf %158, %159 : vector<8x128xf32>
    %161 = arith.mulf %152, %132 : vector<8x128xf32>
    %162 = arith.mulf %146, %154 : vector<8x128xf32>
    %163 = arith.addf %161, %162 : vector<8x128xf32>
    %164 = math.tanh %163 : vector<8x128xf32>
    %165 = arith.mulf %160, %164 : vector<8x128xf32>
    %c5_i32 = arith.constant 5 : i32
    %c8_i32_41 = arith.constant 8 : i32
    %166 = arith.muli %c5_i32, %c8_i32_41 : i32
    %167 = tpu.assume_multiple %166, 8 : i32
    %168 = arith.index_cast %167 : i32 to index
    %c0_42 = arith.constant 0 : index
    %169 = vector.load %arg8[%168, %c0_42] : memref<64x512xf32, #tpu.memory_space<vmem>>, vector<8x512xf32>
    %cst_43 = arith.constant dense<0.000000e+00> : vector<8x512xf32>
    %170 = tpu.matmul %165, %8, %cst_43 {dimension_numbers = #tpu.dot_dimension_numbers<[1], [0], [0], [1], [0, 0, 1, 1], [], []>} : vector<8x128xf32>, vector<128x512xf32>, vector<8x512xf32> -> vector<8x512xf32>
    %171 = arith.addf %169, %170 : vector<8x512xf32>
    %172 = vector.extract_strided_slice %171 {offsets = [0, 0], sizes = [8, 128], strides = [1, 1]} : vector<8x512xf32> to vector<8x128xf32>
    %173 = arith.negf %172 : vector<8x128xf32>
    %174 = math.exp %173 : vector<8x128xf32>
    %cst_44 = arith.constant 1.000000e+00 : f32
    %175 = vector.broadcast %cst_44 : f32 to vector<8x128xf32>
    %176 = arith.addf %175, %174 : vector<8x128xf32>
    %177 = arith.divf %175, %176 : vector<8x128xf32>
    %178 = vector.extract_strided_slice %171 {offsets = [0, 128], sizes = [8, 128], strides = [1, 1]} : vector<8x512xf32> to vector<8x128xf32>
    %179 = arith.negf %178 : vector<8x128xf32>
    %180 = math.exp %179 : vector<8x128xf32>
    %cst_45 = arith.constant 1.000000e+00 : f32
    %181 = vector.broadcast %cst_45 : f32 to vector<8x128xf32>
    %182 = arith.addf %181, %180 : vector<8x128xf32>
    %183 = arith.divf %181, %182 : vector<8x128xf32>
    %184 = vector.extract_strided_slice %171 {offsets = [0, 256], sizes = [8, 128], strides = [1, 1]} : vector<8x512xf32> to vector<8x128xf32>
    %185 = math.tanh %184 : vector<8x128xf32>
    %186 = vector.extract_strided_slice %171 {offsets = [0, 384], sizes = [8, 128], strides = [1, 1]} : vector<8x512xf32> to vector<8x128xf32>
    %187 = arith.negf %186 : vector<8x128xf32>
    %188 = math.exp %187 : vector<8x128xf32>
    %cst_46 = arith.constant 1.000000e+00 : f32
    %189 = vector.broadcast %cst_46 : f32 to vector<8x128xf32>
    %190 = arith.addf %189, %188 : vector<8x128xf32>
    %191 = arith.divf %189, %190 : vector<8x128xf32>
    %192 = arith.mulf %183, %163 : vector<8x128xf32>
    %193 = arith.mulf %177, %185 : vector<8x128xf32>
    %194 = arith.addf %192, %193 : vector<8x128xf32>
    %195 = math.tanh %194 : vector<8x128xf32>
    %196 = arith.mulf %191, %195 : vector<8x128xf32>
    %c6_i32 = arith.constant 6 : i32
    %c8_i32_47 = arith.constant 8 : i32
    %197 = arith.muli %c6_i32, %c8_i32_47 : i32
    %198 = tpu.assume_multiple %197, 8 : i32
    %199 = arith.index_cast %198 : i32 to index
    %c0_48 = arith.constant 0 : index
    %200 = vector.load %arg8[%199, %c0_48] : memref<64x512xf32, #tpu.memory_space<vmem>>, vector<8x512xf32>
    %cst_49 = arith.constant dense<0.000000e+00> : vector<8x512xf32>
    %201 = tpu.matmul %196, %8, %cst_49 {dimension_numbers = #tpu.dot_dimension_numbers<[1], [0], [0], [1], [0, 0, 1, 1], [], []>} : vector<8x128xf32>, vector<128x512xf32>, vector<8x512xf32> -> vector<8x512xf32>
    %202 = arith.addf %200, %201 : vector<8x512xf32>
    %203 = vector.extract_strided_slice %202 {offsets = [0, 0], sizes = [8, 128], strides = [1, 1]} : vector<8x512xf32> to vector<8x128xf32>
    %204 = arith.negf %203 : vector<8x128xf32>
    %205 = math.exp %204 : vector<8x128xf32>
    %cst_50 = arith.constant 1.000000e+00 : f32
    %206 = vector.broadcast %cst_50 : f32 to vector<8x128xf32>
    %207 = arith.addf %206, %205 : vector<8x128xf32>
    %208 = arith.divf %206, %207 : vector<8x128xf32>
    %209 = vector.extract_strided_slice %202 {offsets = [0, 128], sizes = [8, 128], strides = [1, 1]} : vector<8x512xf32> to vector<8x128xf32>
    %210 = arith.negf %209 : vector<8x128xf32>
    %211 = math.exp %210 : vector<8x128xf32>
    %cst_51 = arith.constant 1.000000e+00 : f32
    %212 = vector.broadcast %cst_51 : f32 to vector<8x128xf32>
    %213 = arith.addf %212, %211 : vector<8x128xf32>
    %214 = arith.divf %212, %213 : vector<8x128xf32>
    %215 = vector.extract_strided_slice %202 {offsets = [0, 256], sizes = [8, 128], strides = [1, 1]} : vector<8x512xf32> to vector<8x128xf32>
    %216 = math.tanh %215 : vector<8x128xf32>
    %217 = vector.extract_strided_slice %202 {offsets = [0, 384], sizes = [8, 128], strides = [1, 1]} : vector<8x512xf32> to vector<8x128xf32>
    %218 = arith.negf %217 : vector<8x128xf32>
    %219 = math.exp %218 : vector<8x128xf32>
    %cst_52 = arith.constant 1.000000e+00 : f32
    %220 = vector.broadcast %cst_52 : f32 to vector<8x128xf32>
    %221 = arith.addf %220, %219 : vector<8x128xf32>
    %222 = arith.divf %220, %221 : vector<8x128xf32>
    %223 = arith.mulf %214, %194 : vector<8x128xf32>
    %224 = arith.mulf %208, %216 : vector<8x128xf32>
    %225 = arith.addf %223, %224 : vector<8x128xf32>
    %226 = math.tanh %225 : vector<8x128xf32>
    %227 = arith.mulf %222, %226 : vector<8x128xf32>
    %c7_i32 = arith.constant 7 : i32
    %c8_i32_53 = arith.constant 8 : i32
    %228 = arith.muli %c7_i32, %c8_i32_53 : i32
    %229 = tpu.assume_multiple %228, 8 : i32
    %230 = arith.index_cast %229 : i32 to index
    %c0_54 = arith.constant 0 : index
    %231 = vector.load %arg8[%230, %c0_54] : memref<64x512xf32, #tpu.memory_space<vmem>>, vector<8x512xf32>
    %cst_55 = arith.constant dense<0.000000e+00> : vector<8x512xf32>
    %232 = tpu.matmul %227, %8, %cst_55 {dimension_numbers = #tpu.dot_dimension_numbers<[1], [0], [0], [1], [0, 0, 1, 1], [], []>} : vector<8x128xf32>, vector<128x512xf32>, vector<8x512xf32> -> vector<8x512xf32>
    %233 = arith.addf %231, %232 : vector<8x512xf32>
    %234 = vector.extract_strided_slice %233 {offsets = [0, 0], sizes = [8, 128], strides = [1, 1]} : vector<8x512xf32> to vector<8x128xf32>
    %235 = arith.negf %234 : vector<8x128xf32>
    %236 = math.exp %235 : vector<8x128xf32>
    %cst_56 = arith.constant 1.000000e+00 : f32
    %237 = vector.broadcast %cst_56 : f32 to vector<8x128xf32>
    %238 = arith.addf %237, %236 : vector<8x128xf32>
    %239 = arith.divf %237, %238 : vector<8x128xf32>
    %240 = vector.extract_strided_slice %233 {offsets = [0, 128], sizes = [8, 128], strides = [1, 1]} : vector<8x512xf32> to vector<8x128xf32>
    %241 = arith.negf %240 : vector<8x128xf32>
    %242 = math.exp %241 : vector<8x128xf32>
    %cst_57 = arith.constant 1.000000e+00 : f32
    %243 = vector.broadcast %cst_57 : f32 to vector<8x128xf32>
    %244 = arith.addf %243, %242 : vector<8x128xf32>
    %245 = arith.divf %243, %244 : vector<8x128xf32>
    %246 = vector.extract_strided_slice %233 {offsets = [0, 256], sizes = [8, 128], strides = [1, 1]} : vector<8x512xf32> to vector<8x128xf32>
    %247 = math.tanh %246 : vector<8x128xf32>
    %248 = vector.extract_strided_slice %233 {offsets = [0, 384], sizes = [8, 128], strides = [1, 1]} : vector<8x512xf32> to vector<8x128xf32>
    %249 = arith.negf %248 : vector<8x128xf32>
    %250 = math.exp %249 : vector<8x128xf32>
    %cst_58 = arith.constant 1.000000e+00 : f32
    %251 = vector.broadcast %cst_58 : f32 to vector<8x128xf32>
    %252 = arith.addf %251, %250 : vector<8x128xf32>
    %253 = arith.divf %251, %252 : vector<8x128xf32>
    %254 = arith.mulf %245, %225 : vector<8x128xf32>
    %255 = arith.mulf %239, %247 : vector<8x128xf32>
    %256 = arith.addf %254, %255 : vector<8x128xf32>
    %257 = math.tanh %256 : vector<8x128xf32>
    %258 = arith.mulf %253, %257 : vector<8x128xf32>
    %c8_i32_59 = arith.constant 8 : i32
    %c0_60 = arith.constant 0 : index
    %c0_61 = arith.constant 0 : index
    %259 = vector.load %arg5[%c0_60, %c0_61] : memref<128x5xf32, #tpu.memory_space<vmem>>, vector<128x5xf32>
    %cst_62 = arith.constant dense<0.000000e+00> : vector<8x5xf32>
    %260 = tpu.matmul %258, %259, %cst_62 {dimension_numbers = #tpu.dot_dimension_numbers<[1], [0], [0], [1], [0, 0, 1, 1], [], []>} : vector<8x128xf32>, vector<128x5xf32>, vector<8x5xf32> -> vector<8x5xf32>
    %c0_63 = arith.constant 0 : index
    %c0_64 = arith.constant 0 : index
    %261 = vector.load %arg6[%c0_63, %c0_64] : memref<1x5xf32, #tpu.memory_space<vmem>>, vector<1x5xf32>
    %262 = vector.broadcast %261 : vector<1x5xf32> to vector<8x5xf32>
    %263 = arith.addf %260, %262 : vector<8x5xf32>
    %c0_65 = arith.constant 0 : index
    %c0_66 = arith.constant 0 : index
    %264 = vector.load %arg7[%c0_65, %c0_66] : memref<8x5xf32, #tpu.memory_space<vmem>>, vector<8x5xf32>
    tpu.vector_store %arg7[%c0_65, %c0_66], %263 {strides = array<i32>} : memref<8x5xf32, #tpu.memory_space<vmem>>, vector<8x5xf32>,
    return
  }
  func.func @transform_0(%arg0: i32) -> (i32, i32, i32) {
    %c0_i32 = arith.constant 0 : i32
    %c0_i32_0 = arith.constant 0 : i32
    %c0_i32_1 = arith.constant 0 : i32
    return %arg0, %c0_i32, %c0_i32_0 : i32, i32, i32
  }
  func.func @transform_1(%arg0: i32) -> (i32, i32) {
    %c0_i32 = arith.constant 0 : i32
    %c0_i32_0 = arith.constant 0 : i32
    %c0_i32_1 = arith.constant 0 : i32
    return %c0_i32, %c0_i32_0 : i32, i32
  }
  func.func @transform_2(%arg0: i32) -> (i32, i32) {
    %c0_i32 = arith.constant 0 : i32
    %c0_i32_0 = arith.constant 0 : i32
    %c0_i32_1 = arith.constant 0 : i32
    return %c0_i32, %c0_i32_0 : i32, i32
  }
  func.func @transform_3(%arg0: i32) -> (i32, i32) {
    %c0_i32 = arith.constant 0 : i32
    %c0_i32_0 = arith.constant 0 : i32
    %c0_i32_1 = arith.constant 0 : i32
    return %c0_i32, %c0_i32_0 : i32, i32
  }
  func.func @transform_4(%arg0: i32) -> (i32, i32) {
    %c0_i32 = arith.constant 0 : i32
    %c0_i32_0 = arith.constant 0 : i32
    %c0_i32_1 = arith.constant 0 : i32
    return %c0_i32, %c0_i32_0 : i32, i32
  }
  func.func @transform_5(%arg0: i32) -> (i32, i32) {
    %c0_i32 = arith.constant 0 : i32
    %c0_i32_0 = arith.constant 0 : i32
    %c0_i32_1 = arith.constant 0 : i32
    return %c0_i32, %c0_i32_0 : i32, i32
  }
  func.func @transform_6(%arg0: i32) -> (i32, i32) {
    %c0_i32 = arith.constant 0 : i32
    %c0_i32_0 = arith.constant 0 : i32
    return %arg0, %c0_i32 : i32, i32
  }
}

</mosaic_0001>

<llo_original>
// kernel: tpu_custom_call.1
$region0: #{tpu_custom_call.1}
  #allocation0 [shape = 'u32[]', space=smem, size = 0x4, offset = 0x4, fixed_abs, tag = 'smem constant byte address 0x4 - core index']
  #allocation1 [shape = 'u32[72,128]{1,0:T(1,128)}', space=vmem, size = 0x9000, scoped, tag = 'internal scratch']
  #allocation2 [shape = 'f32[64,512]{1,0:T(8,128)}', space=vmem, size = 0x20000, scoped, tag = 'scratch operand']
  %s0 = inlined_call_operand.vmem [shape: f32[1,64,16], index: 0, kind: input, shape index: {}]
  %s1 = inlined_call_operand.vmem [shape: f32[16,512], index: 1, kind: input, shape index: {}]
  %s2 = inlined_call_operand.hbm [shape: f32[128,512], index: 2, kind: input, shape index: {}]
  %s3 = inlined_call_operand.vmem [shape: f32[1,512], index: 3, kind: input, shape index: {}]
  %s4 = inlined_call_operand.vmem [shape: f32[128,5], index: 4, kind: input, shape index: {}]
  %s5 = inlined_call_operand.vmem [shape: f32[1,5], index: 5, kind: input, shape index: {}]
  %s6 = inlined_call_operand.hbm [shape: f32[8,5], index: 6, kind: output, shape index: {}]
  %s7 = sld [smem:[#allocation0]]
  $region38: #{tpu_custom_call.1} parent=0
    _
  %s9 = ssub.s32 1, %s7
  %s10 = scalar_select 0, %s9, %s7
  $region1: #{tpu_custom_call.1} parent=0
    #allocation3 [shape = 'u8[262144]{0}', space=vmem, size = 0x40000, scoped, tag = 'input window, operand 2, single buffered']
    #allocation4 [shape = 's32[1]{0}', space=sflag, size = 0x4, scoped, tag = 'scoped memory for tpu_custom_call.1']
    #allocation5 [shape = 's32[1]{0}', space=sflag, size = 0x4, scoped, tag = 'scoped memory for tpu_custom_call.1']
    #allocation6 [shape = 'u8[4096]{0}', space=vmem, size = 0x1000, scoped, tag = 'output window, operand 0, single buffered']
    %11 = vsyncpa [#allocation4], 0
    %12 = vsyncpa [#allocation5], 0
    // Predicated region
    $region2: #{tpu_custom_call.1} parent=1 // pred_check
      _
    $region3: #{tpu_custom_call.1} parent=1 // pred_check_branch
      %14 = sbr.rel (0) target = $region5
    $region4: #{tpu_custom_call.1} parent=1 // pred_region
      _
    $region5: #{tpu_custom_call.1} parent=1 // pred_fallthru
      _
    // Predicated region
    $region6: #{tpu_custom_call.1} parent=1 // pred_check
      _
    $region7: #{tpu_custom_call.1} parent=1 // pred_check_branch
      %16 = sbr.rel (0) target = $region9
    $region8: #{tpu_custom_call.1} parent=1 // pred_region
      _
    $region9: #{tpu_custom_call.1} parent=1 // pred_fallthru
      _
    // Predicated region
    $region10: #{tpu_custom_call.1} parent=1 // pred_check
      _
    $region11: #{tpu_custom_call.1} parent=1 // pred_check_branch
      %18 = sbr.rel (0) target = $region13
    $region12: #{tpu_custom_call.1} parent=1 // pred_region
      %20 = vsyncadd [#allocation4], 0
      %s21 = sshll.u32 %s2, 4
      %s22 = int_to_ptr.hbm [resolvable:$true] %s21
      %s23 = sshll.u32 [#allocation3], 4
      %s24 = int_to_ptr.vmem [resolvable:$true] %s23
      %29 = dma.hbm_to_vmem [thread:$0]  %s22, 8192, %s24, [#allocation4], 512, 512, 32
    $region13: #{tpu_custom_call.1} parent=1 // pred_fallthru
      _
    // Predicated region
    $region14: #{tpu_custom_call.1} parent=1 // pred_check
      _
    $region15: #{tpu_custom_call.1} parent=1 // pred_check_branch
      %31 = sbr.rel (0) target = $region17
    $region16: #{tpu_custom_call.1} parent=1 // pred_region
      _
    $region17: #{tpu_custom_call.1} parent=1 // pred_fallthru
      _
    // Predicated region
    $region18: #{tpu_custom_call.1} parent=1 // pred_check
      _
    $region19: #{tpu_custom_call.1} parent=1 // pred_check_branch
      %33 = sbr.rel (0) target = $region21
    $region20: #{tpu_custom_call.1} parent=1 // pred_region
      _
    $region21: #{tpu_custom_call.1} parent=1 // pred_fallthru
      _
    // Predicated region
    $region22: #{tpu_custom_call.1} parent=1 // pred_check
      _
    $region23: #{tpu_custom_call.1} parent=1 // pred_check_branch
      %35 = sbr.rel (0) target = $region25
    $region24: #{tpu_custom_call.1} parent=1 // pred_region
      _
    $region25: #{tpu_custom_call.1} parent=1 // pred_fallthru
      _
    // Predicated region
    $region26: #{tpu_custom_call.1} parent=1 // pred_check
      _
    $region27: #{tpu_custom_call.1} parent=1 // pred_check_branch
      %37 = sbr.rel (0) target = $region29
    $region28: #{tpu_custom_call.1} parent=1 // pred_region
      %39 = dma.done [#allocation4], 8192
    $region29: #{tpu_custom_call.1} parent=1 // pred_fallthru
      _
    %v40 = vld [vmem:[%s0] sm:$0xff]
    %v41 = vld [vmem:[%s0 + $0x8] sm:$0xff]
    %v42 = vld [vmem:[%s0 + $0x10] sm:$0xff]
    %v43 = vld [vmem:[%s0 + $0x18] sm:$0xff]
    %v44 = vld [vmem:[%s0 + $0x20] sm:$0xff]
    %v45 = vld [vmem:[%s0 + $0x28] sm:$0xff]
    %v46 = vld [vmem:[%s0 + $0x30] sm:$0xff]
    %v47 = vld [vmem:[%s0 + $0x38] sm:$0xff]
    %v48 = vld [vmem:[%s1] sm:$0xff]
    %v49 = vld [vmem:[%s1 + $0x8] sm:$0xff]
    %v50 = vld [vmem:[%s1 + $0x10] sm:$0xff]
    %v51 = vld [vmem:[%s1 + $0x18] sm:$0xff]
    %v52 = vld [vmem:[%s1 + $0x20] sm:$0xff]
    %v53 = vld [vmem:[%s1 + $0x28] sm:$0xff]
    %v54 = vld [vmem:[%s1 + $0x30] sm:$0xff]
    %v55 = vld [vmem:[%s1 + $0x38] sm:$0xff]
    %v56 = vld [vmem:[%s3] sm:$0xf]
    %v58 = vperm.slane %v56, 0
    %v59 = vperm.slane %v56, 1
    %v60 = vperm.slane %v56, 2
    %v61 = vperm.slane %v56, 3
    %vm66 = vcmask 130048
    %v68 = vsel %vm66, %v40, 0
    %v71 = vsel %vm66, %v41, 0
    %v74 = vsel %vm66, %v42, 0
    %v77 = vsel %vm66, %v43, 0
    %v80 = vsel %vm66, %v44, 0
    %v83 = vsel %vm66, %v45, 0
    %v86 = vsel %vm66, %v46, 0
    %v89 = vsel %vm66, %v47, 0
    %91 = vmatpush.msra.mxu0 0.0
    %92 = vmatpush.msra.mxu0 0.0
    %93 = vmatpush.msra.mxu0 0.0
    %94 = vmatpush.msra.mxu0 0.0
    %95 = vmatpush.msra.mxu0 0.0
    %96 = vmatpush.msra.mxu0 0.0
    %97 = vmatpush.msra.mxu0 0.0
    %98 = vmatpush.msra.mxu0 0.0
    %99 = vmatpush.msra.mxu0 0.0
    %100 = vmatpush.msra.mxu0 0.0
    %101 = vmatpush.msra.mxu0 0.0
    %102 = vmatpush.msra.mxu0 0.0
    %103 = vmatpush.msra.mxu0 0.0
    %104 = vmatpush.msra.mxu0 0.0
    %105 = vmatpush.msra.mxu0 %v52
    %106 = vmatpush.msra.mxu0 %v48
    %107 = vmatmul.f32.gmra.mxu0 %v68
    %v108 = vpop.f32.mrf.mxu0
    %v109 = vadd.f32 %v58, %v108
    %110 = vmatmul.f32.gmra.mxu0 %v71
    %v111 = vpop.f32.mrf.mxu0
    %v112 = vadd.f32 %v58, %v111
    %113 = vmatmul.f32.gmra.mxu0 %v74
    %v114 = vpop.f32.mrf.mxu0
    %v115 = vadd.f32 %v58, %v114
    %116 = vmatmul.f32.gmra.mxu0 %v77
    %v117 = vpop.f32.mrf.mxu0
    %v118 = vadd.f32 %v58, %v117
    %119 = vmatmul.f32.gmra.mxu0 %v80
    %v120 = vpop.f32.mrf.mxu0
    %v121 = vadd.f32 %v58, %v120
    %122 = vmatmul.f32.gmra.mxu0 %v83
    %v123 = vpop.f32.mrf.mxu0
    %v124 = vadd.f32 %v58, %v123
    %125 = vmatmul.f32.gmra.mxu0 %v86
    %v126 = vpop.f32.mrf.mxu0
    %v127 = vadd.f32 %v58, %v126
    %128 = vmatmul.f32.gmra.mxu0 %v89
    %v129 = vpop.f32.mrf.mxu0
    %v130 = vadd.f32 %v58, %v129
    %131 = vdwg.mxu0
    %132 = vmatpush.msra.mxu0 0.0
    %133 = vmatpush.msra.mxu0 0.0
    %134 = vmatpush.msra.mxu0 0.0
    %135 = vmatpush.msra.mxu0 0.0
    %136 = vmatpush.msra.mxu0 0.0
    %137 = vmatpush.msra.mxu0 0.0
    %138 = vmatpush.msra.mxu0 0.0
    %139 = vmatpush.msra.mxu0 0.0
    %140 = vmatpush.msra.mxu0 0.0
    %141 = vmatpush.msra.mxu0 0.0
    %142 = vmatpush.msra.mxu0 0.0
    %143 = vmatpush.msra.mxu0 0.0
    %144 = vmatpush.msra.mxu0 0.0
    %145 = vmatpush.msra.mxu0 0.0
    %146 = vmatpush.msra.mxu0 %v53
    %147 = vmatpush.msra.mxu0 %v49
    %148 = vmatmul.f32.gmra.mxu0 %v68
    %v149 = vpop.f32.mrf.mxu0
    %v150 = vadd.f32 %v59, %v149
    %151 = vmatmul.f32.gmra.mxu0 %v71
    %v152 = vpop.f32.mrf.mxu0
    %v153 = vadd.f32 %v59, %v152
    %154 = vmatmul.f32.gmra.mxu0 %v74
    %v155 = vpop.f32.mrf.mxu0
    %v156 = vadd.f32 %v59, %v155
    %157 = vmatmul.f32.gmra.mxu0 %v77
    %v158 = vpop.f32.mrf.mxu0
    %v159 = vadd.f32 %v59, %v158
    %160 = vmatmul.f32.gmra.mxu0 %v80
    %v161 = vpop.f32.mrf.mxu0
    %v162 = vadd.f32 %v59, %v161
    %163 = vmatmul.f32.gmra.mxu0 %v83
    %v164 = vpop.f32.mrf.mxu0
    %v165 = vadd.f32 %v59, %v164
    %166 = vmatmul.f32.gmra.mxu0 %v86
    %v167 = vpop.f32.mrf.mxu0
    %v168 = vadd.f32 %v59, %v167
    %169 = vmatmul.f32.gmra.mxu0 %v89
    %v170 = vpop.f32.mrf.mxu0
    %v171 = vadd.f32 %v59, %v170
    %172 = vdwg.mxu0
    %173 = vmatpush.msra.mxu0 0.0
    %174 = vmatpush.msra.mxu0 0.0
    %175 = vmatpush.msra.mxu0 0.0
    %176 = vmatpush.msra.mxu0 0.0
    %177 = vmatpush.msra.mxu0 0.0
    %178 = vmatpush.msra.mxu0 0.0
    %179 = vmatpush.msra.mxu0 0.0
    %180 = vmatpush.msra.mxu0 0.0
    %181 = vmatpush.msra.mxu0 0.0
    %182 = vmatpush.msra.mxu0 0.0
    %183 = vmatpush.msra.mxu0 0.0
    %184 = vmatpush.msra.mxu0 0.0
    %185 = vmatpush.msra.mxu0 0.0
    %186 = vmatpush.msra.mxu0 0.0
    %187 = vmatpush.msra.mxu0 %v54
    %188 = vmatpush.msra.mxu0 %v50
    %189 = vmatmul.f32.gmra.mxu0 %v68
    %v190 = vpop.f32.mrf.mxu0
    %v191 = vadd.f32 %v60, %v190
    %192 = vmatmul.f32.gmra.mxu0 %v71
    %v193 = vpop.f32.mrf.mxu0
    %v194 = vadd.f32 %v60, %v193
    %195 = vmatmul.f32.gmra.mxu0 %v74
    %v196 = vpop.f32.mrf.mxu0
    %v197 = vadd.f32 %v60, %v196
    %198 = vmatmul.f32.gmra.mxu0 %v77
    %v199 = vpop.f32.mrf.mxu0
    %v200 = vadd.f32 %v60, %v199
    %201 = vmatmul.f32.gmra.mxu0 %v80
    %v202 = vpop.f32.mrf.mxu0
    %v203 = vadd.f32 %v60, %v202
    %204 = vmatmul.f32.gmra.mxu0 %v83
    %v205 = vpop.f32.mrf.mxu0
    %v206 = vadd.f32 %v60, %v205
    %207 = vmatmul.f32.gmra.mxu0 %v86
    %v208 = vpop.f32.mrf.mxu0
    %v209 = vadd.f32 %v60, %v208
    %210 = vmatmul.f32.gmra.mxu0 %v89
    %v211 = vpop.f32.mrf.mxu0
    %v212 = vadd.f32 %v60, %v211
    %213 = vdwg.mxu0
    %214 = vmatpush.msra.mxu0 0.0
    %215 = vmatpush.msra.mxu0 0.0
    %216 = vmatpush.msra.mxu0 0.0
    %217 = vmatpush.msra.mxu0 0.0
    %218 = vmatpush.msra.mxu0 0.0
    %219 = vmatpush.msra.mxu0 0.0
    %220 = vmatpush.msra.mxu0 0.0
    %221 = vmatpush.msra.mxu0 0.0
    %222 = vmatpush.msra.mxu0 0.0
    %223 = vmatpush.msra.mxu0 0.0
    %224 = vmatpush.msra.mxu0 0.0
    %225 = vmatpush.msra.mxu0 0.0
    %226 = vmatpush.msra.mxu0 0.0
    %227 = vmatpush.msra.mxu0 0.0
    %228 = vmatpush.msra.mxu0 %v55
    %229 = vmatpush.msra.mxu0 %v51
    %230 = vmatmul.f32.gmra.mxu0 %v68
    %v231 = vpop.f32.mrf.mxu0
    %v232 = vadd.f32 %v61, %v231
    %233 = vmatmul.f32.gmra.mxu0 %v71
    %v234 = vpop.f32.mrf.mxu0
    %v235 = vadd.f32 %v61, %v234
    %236 = vmatmul.f32.gmra.mxu0 %v74
    %v237 = vpop.f32.mrf.mxu0
    %v238 = vadd.f32 %v61, %v237
    %239 = vmatmul.f32.gmra.mxu0 %v77
    %v240 = vpop.f32.mrf.mxu0
    %v241 = vadd.f32 %v61, %v240
    %242 = vmatmul.f32.gmra.mxu0 %v80
    %v243 = vpop.f32.mrf.mxu0
    %v244 = vadd.f32 %v61, %v243
    %245 = vmatmul.f32.gmra.mxu0 %v83
    %v246 = vpop.f32.mrf.mxu0
    %v247 = vadd.f32 %v61, %v246
    %248 = vmatmul.f32.gmra.mxu0 %v86
    %v249 = vpop.f32.mrf.mxu0
    %v250 = vadd.f32 %v61, %v249
    %251 = vmatmul.f32.gmra.mxu0 %v89
    %v252 = vpop.f32.mrf.mxu0
    %v253 = vadd.f32 %v61, %v252
    %254 = vdwg.mxu0
    %255 = vst [vmem:[#allocation2] sm:$0xff] %v109
    %256 = vst [vmem:[#allocation2 + $0x8] sm:$0xff] %v150
    %257 = vst [vmem:[#allocation2 + $0x10] sm:$0xff] %v191
    %258 = vst [vmem:[#allocation2 + $0x18] sm:$0xff] %v232
    %259 = vst [vmem:[#allocation2 + $0x20] sm:$0xff] %v112
    %260 = vst [vmem:[#allocation2 + $0x28] sm:$0xff] %v153
    %261 = vst [vmem:[#allocation2 + $0x30] sm:$0xff] %v194
    %262 = vst [vmem:[#allocation2 + $0x38] sm:$0xff] %v235
    %263 = vst [vmem:[#allocation2 + $0x40] sm:$0xff] %v115
    %264 = vst [vmem:[#allocation2 + $0x48] sm:$0xff] %v156
    %265 = vst [vmem:[#allocation2 + $0x50] sm:$0xff] %v197
    %266 = vst [vmem:[#allocation2 + $0x58] sm:$0xff] %v238
    %267 = vst [vmem:[#allocation2 + $0x60] sm:$0xff] %v118
    %268 = vst [vmem:[#allocation2 + $0x68] sm:$0xff] %v159
    %269 = vst [vmem:[#allocation2 + $0x70] sm:$0xff] %v200
    %270 = vst [vmem:[#allocation2 + $0x78] sm:$0xff] %v241
    %271 = vst [vmem:[#allocation2 + $0x80] sm:$0xff] %v121
    %272 = vst [vmem:[#allocation2 + $0x88] sm:$0xff] %v162
    %273 = vst [vmem:[#allocation2 + $0x90] sm:$0xff] %v203
    %274 = vst [vmem:[#allocation2 + $0x98] sm:$0xff] %v244
    %275 = vst [vmem:[#allocation2 + $0xa0] sm:$0xff] %v124
    %276 = vst [vmem:[#allocation2 + $0xa8] sm:$0xff] %v165
    %277 = vst [vmem:[#allocation2 + $0xb0] sm:$0xff] %v206
    %278 = vst [vmem:[#allocation2 + $0xb8] sm:$0xff] %v247
    %279 = vst [vmem:[#allocation2 + $0xc0] sm:$0xff] %v127
    %280 = vst [vmem:[#allocation2 + $0xc8] sm:$0xff] %v168
    %281 = vst [vmem:[#allocation2 + $0xd0] sm:$0xff] %v209
    %282 = vst [vmem:[#allocation2 + $0xd8] sm:$0xff] %v250
    %283 = vst [vmem:[#allocation2 + $0xe0] sm:$0xff] %v130
    %284 = vst [vmem:[#allocation2 + $0xe8] sm:$0xff] %v171
    %285 = vst [vmem:[#allocation2 + $0xf0] sm:$0xff] %v212
    %286 = vst [vmem:[#allocation2 + $0xf8] sm:$0xff] %v253
    %v287 = vld [vmem:[#allocation3] sm:$0xff]
    %v288 = vld [vmem:[#allocation3 + $0x8] sm:$0xff]
    %v289 = vld [vmem:[#allocation3 + $0x10] sm:$0xff]
    %v290 = vld [vmem:[#allocation3 + $0x18] sm:$0xff]
    %v291 = vld [vmem:[#allocation3 + $0x20] sm:$0xff]
    %v292 = vld [vmem:[#allocation3 + $0x28] sm:$0xff]
    %v293 = vld [vmem:[#allocation3 + $0x30] sm:$0xff]
    %v294 = vld [vmem:[#allocation3 + $0x38] sm:$0xff]
    %v295 = vld [vmem:[#allocation3 + $0x40] sm:$0xff]
    %v296 = vld [vmem:[#allocation3 + $0x48] sm:$0xff]
    %v297 = vld [vmem:[#allocation3 + $0x50] sm:$0xff]
    %v298 = vld [vmem:[#allocation3 + $0x58] sm:$0xff]
    %v299 = vld [vmem:[#allocation3 + $0x60] sm:$0xff]
    %v300 = vld [vmem:[#allocation3 + $0x68] sm:$0xff]
    %v301 = vld [vmem:[#allocation3 + $0x70] sm:$0xff]
    %v302 = vld [vmem:[#allocation3 + $0x78] sm:$0xff]
    %v303 = vld [vmem:[#allocation3 + $0x80] sm:$0xff]
    %v304 = vld [vmem:[#allocation3 + $0x88] sm:$0xff]
    %v305 = vld [vmem:[#allocation3 + $0x90] sm:$0xff]
    %v306 = vld [vmem:[#allocation3 + $0x98] sm:$0xff]
    %v307 = vld [vmem:[#allocation3 + $0xa0] sm:$0xff]
    %v308 = vld [vmem:[#allocation3 + $0xa8] sm:$0xff]
    %v309 = vld [vmem:[#allocation3 + $0xb0] sm:$0xff]
    %v310 = vld [vmem:[#allocation3 + $0xb8] sm:$0xff]
    %v311 = vld [vmem:[#allocation3 + $0xc0] sm:$0xff]
    %v312 = vld [vmem:[#allocation3 + $0xc8] sm:$0xff]
    %v313 = vld [vmem:[#allocation3 + $0xd0] sm:$0xff]
    %v314 = vld [vmem:[#allocation3 + $0xd8] sm:$0xff]
    %v315 = vld [vmem:[#allocation3 + $0xe0] sm:$0xff]
    %v316 = vld [vmem:[#allocation3 + $0xe8] sm:$0xff]
    %v317 = vld [vmem:[#allocation3 + $0xf0] sm:$0xff]
    %v318 = vld [vmem:[#allocation3 + $0xf8] sm:$0xff]
    %v319 = vld [vmem:[#allocation3 + $0x100] sm:$0xff]
    %v320 = vld [vmem:[#allocation3 + $0x108] sm:$0xff]
    %v321 = vld [vmem:[#allocation3 + $0x110] sm:$0xff]
    %v322 = vld [vmem:[#allocation3 + $0x118] sm:$0xff]
    %v323 = vld [vmem:[#allocation3 + $0x120] sm:$0xff]
    %v324 = vld [vmem:[#allocation3 + $0x128] sm:$0xff]
    %v325 = vld [vmem:[#allocation3 + $0x130] sm:$0xff]
    %v326 = vld [vmem:[#allocation3 + $0x138] sm:$0xff]
    %v327 = vld [vmem:[#allocation3 + $0x140] sm:$0xff]
    %v328 = vld [vmem:[#allocation3 + $0x148] sm:$0xff]
    %v329 = vld [vmem:[#allocation3 + $0x150] sm:$0xff]
    %v330 = vld [vmem:[#allocation3 + $0x158] sm:$0xff]
    %v331 = vld [vmem:[#allocation3 + $0x160] sm:$0xff]
    %v332 = vld [vmem:[#allocation3 + $0x168] sm:$0xff]
    %v333 = vld [vmem:[#allocation3 + $0x170] sm:$0xff]
    %v334 = vld [vmem:[#allocation3 + $0x178] sm:$0xff]
    %v335 = vld [vmem:[#allocation3 + $0x180] sm:$0xff]
    %v336 = vld [vmem:[#allocation3 + $0x188] sm:$0xff]
    %v337 = vld [vmem:[#allocation3 + $0x190] sm:$0xff]
    %v338 = vld [vmem:[#allocation3 + $0x198] sm:$0xff]
    %v339 = vld [vmem:[#allocation3 + $0x1a0] sm:$0xff]
    %v340 = vld [vmem:[#allocation3 + $0x1a8] sm:$0xff]
    %v341 = vld [vmem:[#allocation3 + $0x1b0] sm:$0xff]
    %v342 = vld [vmem:[#allocation3 + $0x1b8] sm:$0xff]
    %v343 = vld [vmem:[#allocation3 + $0x1c0] sm:$0xff]
    %v344 = vld [vmem:[#allocation3 + $0x1c8] sm:$0xff]
    %v345 = vld [vmem:[#allocation3 + $0x1d0] sm:$0xff]
    %v346 = vld [vmem:[#allocation3 + $0x1d8] sm:$0xff]
    %v347 = vld [vmem:[#allocation3 + $0x1e0] sm:$0xff]
    %v348 = vld [vmem:[#allocation3 + $0x1e8] sm:$0xff]
    %v349 = vld [vmem:[#allocation3 + $0x1f0] sm:$0xff]
    %v350 = vld [vmem:[#allocation3 + $0x1f8] sm:$0xff]
    %s351 = smul.u32 0, 4
    %s352 = smul.addr %s351, 8
    %s353 = scalar_lea.vmem [#allocation2], %s352
    %v354 = vld [vmem:[%s353] sm:$0xff]
    %v355 = vld [vmem:[%s353 + $0x8] sm:$0xff]
    %v356 = vld [vmem:[%s353 + $0x10] sm:$0xff]
    %v357 = vld [vmem:[%s353 + $0x18] sm:$0xff]
    %358 = vmatpush.msra.mxu0 %v347
    %359 = vmatpush.msra.mxu0 %v343
    %360 = vmatpush.msra.mxu0 %v339
    %361 = vmatpush.msra.mxu0 %v335
    %362 = vmatpush.msra.mxu0 %v331
    %363 = vmatpush.msra.mxu0 %v327
    %364 = vmatpush.msra.mxu0 %v323
    %365 = vmatpush.msra.mxu0 %v319
    %366 = vmatpush.msra.mxu0 %v315
    %367 = vmatpush.msra.mxu0 %v311
    %368 = vmatpush.msra.mxu0 %v307
    %369 = vmatpush.msra.mxu0 %v303
    %370 = vmatpush.msra.mxu0 %v299
    %371 = vmatpush.msra.mxu0 %v295
    %372 = vmatpush.msra.mxu0 %v291
    %373 = vmatpush.msra.mxu0 %v287
    %374 = vmatmul.f32.gmra.mxu0 0.0
    %v375 = vpop.f32.mrf.mxu0
    %v376 = vadd.f32 0.0, %v375
    %377 = vdwg.mxu0
    %378 = vmatpush.msra.mxu0 %v348
    %379 = vmatpush.msra.mxu0 %v344
    %380 = vmatpush.msra.mxu0 %v340
    %381 = vmatpush.msra.mxu0 %v336
    %382 = vmatpush.msra.mxu0 %v332
    %383 = vmatpush.msra.mxu0 %v328
    %384 = vmatpush.msra.mxu0 %v324
    %385 = vmatpush.msra.mxu0 %v320
    %386 = vmatpush.msra.mxu0 %v316
    %387 = vmatpush.msra.mxu0 %v312
    %388 = vmatpush.msra.mxu0 %v308
    %389 = vmatpush.msra.mxu0 %v304
    %390 = vmatpush.msra.mxu0 %v300
    %391 = vmatpush.msra.mxu0 %v296
    %392 = vmatpush.msra.mxu0 %v292
    %393 = vmatpush.msra.mxu0 %v288
    %394 = vmatmul.f32.gmra.mxu0 0.0
    %v395 = vpop.f32.mrf.mxu0
    %v396 = vadd.f32 0.0, %v395
    %397 = vdwg.mxu0
    %398 = vmatpush.msra.mxu0 %v349
    %399 = vmatpush.msra.mxu0 %v345
    %400 = vmatpush.msra.mxu0 %v341
    %401 = vmatpush.msra.mxu0 %v337
    %402 = vmatpush.msra.mxu0 %v333
    %403 = vmatpush.msra.mxu0 %v329
    %404 = vmatpush.msra.mxu0 %v325
    %405 = vmatpush.msra.mxu0 %v321
    %406 = vmatpush.msra.mxu0 %v317
    %407 = vmatpush.msra.mxu0 %v313
    %408 = vmatpush.msra.mxu0 %v309
    %409 = vmatpush.msra.mxu0 %v305
    %410 = vmatpush.msra.mxu0 %v301
    %411 = vmatpush.msra.mxu0 %v297
    %412 = vmatpush.msra.mxu0 %v293
    %413 = vmatpush.msra.mxu0 %v289
    %414 = vmatmul.f32.gmra.mxu0 0.0
    %v415 = vpop.f32.mrf.mxu0
    %v416 = vadd.f32 0.0, %v415
    %417 = vdwg.mxu0
    %418 = vmatpush.msra.mxu0 %v350
    %419 = vmatpush.msra.mxu0 %v346
    %420 = vmatpush.msra.mxu0 %v342
    %421 = vmatpush.msra.mxu0 %v338
    %422 = vmatpush.msra.mxu0 %v334
    %423 = vmatpush.msra.mxu0 %v330
    %424 = vmatpush.msra.mxu0 %v326
    %425 = vmatpush.msra.mxu0 %v322
    %426 = vmatpush.msra.mxu0 %v318
    %427 = vmatpush.msra.mxu0 %v314
    %428 = vmatpush.msra.mxu0 %v310
    %429 = vmatpush.msra.mxu0 %v306
    %430 = vmatpush.msra.mxu0 %v302
    %431 = vmatpush.msra.mxu0 %v298
    %432 = vmatpush.msra.mxu0 %v294
    %433 = vmatpush.msra.mxu0 %v290
    %434 = vmatmul.f32.gmra.mxu0 0.0
    %v435 = vpop.f32.mrf.mxu0
    %v436 = vadd.f32 0.0, %v435
    %437 = vdwg.mxu0
    %v438 = vadd.f32 %v354, %v376
    %v439 = vadd.f32 %v355, %v396
    %v440 = vadd.f32 %v356, %v416
    %v441 = vadd.f32 %v357, %v436
    %v442 = vxor.u32 %v438, 2147483648
    %v443 = vmul.f32 %v442, 1.442695
    %v444 = vpow.pop %v443
    %v445 = vadd.f32 %v444, 1.0
    %v446 = vrcp.pop %v445
    %v447 = vmul.f32 %v445, %v446
    %v448 = vsub.f32 1.0, %v447
    %v449 = vmul.f32 %v446, %v448
    %v450 = vadd.f32 %v446, %v449
    %vm451 = vweird.f32 %v445
    %vm452 = vweird.f32 %v446
    %vm453 = vmor %vm451, %vm452
    %v454 = vsel %vm453, %v446, %v450
    %v455 = vand.u32 2147483647, %v445
    %vm456 = vcmp.eq.f32.partialorder %v455, 8.507059e+37
    %v457 = vand.u32 %v445, 2147483648
    %v458 = vor.u32 1.1754944e-38, %v457
    %v459 = vsel %vm456, %v458, %v454
    %v460 = vmul.f32 1.0, %v459
    %v461 = vxor.u32 %v439, 2147483648
    %v462 = vmul.f32 %v461, 1.442695
    %v463 = vpow.pop %v462
    %v464 = vadd.f32 %v463, 1.0
    %v465 = vrcp.pop %v464
    %v466 = vmul.f32 %v464, %v465
    %v467 = vsub.f32 1.0, %v466
    %v468 = vmul.f32 %v465, %v467
    %v469 = vadd.f32 %v465, %v468
    %vm470 = vweird.f32 %v464
    %vm471 = vweird.f32 %v465
    %vm472 = vmor %vm470, %vm471
    %v473 = vsel %vm472, %v465, %v469
    %v474 = vand.u32 2147483647, %v464
    %vm475 = vcmp.eq.f32.partialorder %v474, 8.507059e+37
    %v476 = vand.u32 %v464, 2147483648
    %v477 = vor.u32 1.1754944e-38, %v476
    %v478 = vsel %vm475, %v477, %v473
    %v479 = vmul.f32 1.0, %v478
    %v480 = vtanh.pop %v440
    %v481 = vxor.u32 %v441, 2147483648
    %v482 = vmul.f32 %v481, 1.442695
    %v483 = vpow.pop %v482
    %v484 = vadd.f32 %v483, 1.0
    %v485 = vrcp.pop %v484
    %v486 = vmul.f32 %v484, %v485
    %v487 = vsub.f32 1.0, %v486
    %v488 = vmul.f32 %v485, %v487
    %v489 = vadd.f32 %v485, %v488
    %vm490 = vweird.f32 %v484
    %vm491 = vweird.f32 %v485
    %vm492 = vmor %vm490, %vm491
    %v493 = vsel %vm492, %v485, %v489
    %v494 = vand.u32 2147483647, %v484
    %vm495 = vcmp.eq.f32.partialorder %v494, 8.507059e+37
    %v496 = vand.u32 %v484, 2147483648
    %v497 = vor.u32 1.1754944e-38, %v496
    %v498 = vsel %vm495, %v497, %v493
    %v499 = vmul.f32 1.0, %v498
    %v500 = vmul.f32 %v479, 0.0
    %v501 = vmul.f32 %v460, %v480
    %v502 = vadd.f32 %v500, %v501
    %v503 = vtanh.pop %v502
    %v504 = vmul.f32 %v499, %v503
    %s505 = smul.u32 1, 4
    %s506 = smul.addr %s505, 8
    %s507 = scalar_lea.vmem [#allocation2], %s506
    %v508 = vld [vmem:[%s507] sm:$0xff]
    %v509 = vld [vmem:[%s507 + $0x8] sm:$0xff]
    %v510 = vld [vmem:[%s507 + $0x10] sm:$0xff]
    %v511 = vld [vmem:[%s507 + $0x18] sm:$0xff]
    %512 = vmatpush.msra.mxu0 %v347
    %513 = vmatpush.msra.mxu0 %v343
    %514 = vmatpush.msra.mxu0 %v339
    %515 = vmatpush.msra.mxu0 %v335
    %516 = vmatpush.msra.mxu0 %v331
    %517 = vmatpush.msra.mxu0 %v327
    %518 = vmatpush.msra.mxu0 %v323
    %519 = vmatpush.msra.mxu0 %v319
    %520 = vmatpush.msra.mxu0 %v315
    %521 = vmatpush.msra.mxu0 %v311
    %522 = vmatpush.msra.mxu0 %v307
    %523 = vmatpush.msra.mxu0 %v303
    %524 = vmatpush.msra.mxu0 %v299
    %525 = vmatpush.msra.mxu0 %v295
    %526 = vmatpush.msra.mxu0 %v291
    %527 = vmatpush.msra.mxu0 %v287
    %528 = vmatmul.f32.gmra.mxu0 %v504
    %v529 = vpop.f32.mrf.mxu0
    %v530 = vadd.f32 0.0, %v529
    %531 = vdwg.mxu0
    %532 = vmatpush.msra.mxu0 %v348
    %533 = vmatpush.msra.mxu0 %v344
    %534 = vmatpush.msra.mxu0 %v340
    %535 = vmatpush.msra.mxu0 %v336
    %536 = vmatpush.msra.mxu0 %v332
    %537 = vmatpush.msra.mxu0 %v328
    %538 = vmatpush.msra.mxu0 %v324
    %539 = vmatpush.msra.mxu0 %v320
    %540 = vmatpush.msra.mxu0 %v316
    %541 = vmatpush.msra.mxu0 %v312
    %542 = vmatpush.msra.mxu0 %v308
    %543 = vmatpush.msra.mxu0 %v304
    %544 = vmatpush.msra.mxu0 %v300
    %545 = vmatpush.msra.mxu0 %v296
    %546 = vmatpush.msra.mxu0 %v292
    %547 = vmatpush.msra.mxu0 %v288
    %548 = vmatmul.f32.gmra.mxu0 %v504
    %v549 = vpop.f32.mrf.mxu0
    %v550 = vadd.f32 0.0, %v549
    %551 = vdwg.mxu0
    %552 = vmatpush.msra.mxu0 %v349
    %553 = vmatpush.msra.mxu0 %v345
    %554 = vmatpush.msra.mxu0 %v341
    %555 = vmatpush.msra.mxu0 %v337
    %556 = vmatpush.msra.mxu0 %v333
    %557 = vmatpush.msra.mxu0 %v329
    %558 = vmatpush.msra.mxu0 %v325
    %559 = vmatpush.msra.mxu0 %v321
    %560 = vmatpush.msra.mxu0 %v317
    %561 = vmatpush.msra.mxu0 %v313
    %562 = vmatpush.msra.mxu0 %v309
    %563 = vmatpush.msra.mxu0 %v305
    %564 = vmatpush.msra.mxu0 %v301
    %565 = vmatpush.msra.mxu0 %v297
    %566 = vmatpush.msra.mxu0 %v293
    %567 = vmatpush.msra.mxu0 %v289
    %568 = vmatmul.f32.gmra.mxu0 %v504
    %v569 = vpop.f32.mrf.mxu0
    %v570 = vadd.f32 0.0, %v569
    %571 = vdwg.mxu0
    %572 = vmatpush.msra.mxu0 %v350
    %573 = vmatpush.msra.mxu0 %v346
    %574 = vmatpush.msra.mxu0 %v342
    %575 = vmatpush.msra.mxu0 %v338
    %576 = vmatpush.msra.mxu0 %v334
    %577 = vmatpush.msra.mxu0 %v330
    %578 = vmatpush.msra.mxu0 %v326
    %579 = vmatpush.msra.mxu0 %v322
    %580 = vmatpush.msra.mxu0 %v318
    %581 = vmatpush.msra.mxu0 %v314
    %582 = vmatpush.msra.mxu0 %v310
    %583 = vmatpush.msra.mxu0 %v306
    %584 = vmatpush.msra.mxu0 %v302
    %585 = vmatpush.msra.mxu0 %v298
    %586 = vmatpush.msra.mxu0 %v294
    %587 = vmatpush.msra.mxu0 %v290
    %588 = vmatmul.f32.gmra.mxu0 %v504
    %v589 = vpop.f32.mrf.mxu0
    %v590 = vadd.f32 0.0, %v589
    %591 = vdwg.mxu0
    %v592 = vadd.f32 %v508, %v530
    %v593 = vadd.f32 %v509, %v550
    %v594 = vadd.f32 %v510, %v570
    %v595 = vadd.f32 %v511, %v590
    %v596 = vxor.u32 %v592, 2147483648
    %v597 = vmul.f32 %v596, 1.442695
    %v598 = vpow.pop %v597
    %v599 = vadd.f32 %v598, 1.0
    %v600 = vrcp.pop %v599
    %v601 = vmul.f32 %v599, %v600
    %v602 = vsub.f32 1.0, %v601
    %v603 = vmul.f32 %v600, %v602
    %v604 = vadd.f32 %v600, %v603
    %vm605 = vweird.f32 %v599
    %vm606 = vweird.f32 %v600
    %vm607 = vmor %vm605, %vm606
    %v608 = vsel %vm607, %v600, %v604
    %v609 = vand.u32 2147483647, %v599
    %vm610 = vcmp.eq.f32.partialorder %v609, 8.507059e+37
    %v611 = vand.u32 %v599, 2147483648
    %v612 = vor.u32 1.1754944e-38, %v611
    %v613 = vsel %vm610, %v612, %v608
    %v614 = vmul.f32 1.0, %v613
    %v615 = vxor.u32 %v593, 2147483648
    %v616 = vmul.f32 %v615, 1.442695
    %v617 = vpow.pop %v616
    %v618 = vadd.f32 %v617, 1.0
    %v619 = vrcp.pop %v618
    %v620 = vmul.f32 %v618, %v619
    %v621 = vsub.f32 1.0, %v620
    %v622 = vmul.f32 %v619, %v621
    %v623 = vadd.f32 %v619, %v622
    %vm624 = vweird.f32 %v618
    %vm625 = vweird.f32 %v619
    %vm626 = vmor %vm624, %vm625
    %v627 = vsel %vm626, %v619, %v623
    %v628 = vand.u32 2147483647, %v618
    %vm629 = vcmp.eq.f32.partialorder %v628, 8.507059e+37
    %v630 = vand.u32 %v618, 2147483648
    %v631 = vor.u32 1.1754944e-38, %v630
    %v632 = vsel %vm629, %v631, %v627
    %v633 = vmul.f32 1.0, %v632
    %v634 = vtanh.pop %v594
    %v635 = vxor.u32 %v595, 2147483648
    %v636 = vmul.f32 %v635, 1.442695
    %v637 = vpow.pop %v636
    %v638 = vadd.f32 %v637, 1.0
    %v639 = vrcp.pop %v638
    %v640 = vmul.f32 %v638, %v639
    %v641 = vsub.f32 1.0, %v640
    %v642 = vmul.f32 %v639, %v641
    %v643 = vadd.f32 %v639, %v642
    %vm644 = vweird.f32 %v638
    %vm645 = vweird.f32 %v639
    %vm646 = vmor %vm644, %vm645
    %v647 = vsel %vm646, %v639, %v643
    %v648 = vand.u32 2147483647, %v638
    %vm649 = vcmp.eq.f32.partialorder %v648, 8.507059e+37
    %v650 = vand.u32 %v638, 2147483648
    %v651 = vor.u32 1.1754944e-38, %v650
    %v652 = vsel %vm649, %v651, %v647
    %v653 = vmul.f32 1.0, %v652
    %v654 = vmul.f32 %v633, %v502
    %v655 = vmul.f32 %v614, %v634
    %v656 = vadd.f32 %v654, %v655
    %v657 = vtanh.pop %v656
    %v658 = vmul.f32 %v653, %v657
    %s659 = smul.u32 2, 4
    %s660 = smul.addr %s659, 8
    %s661 = scalar_lea.vmem [#allocation2], %s660
    %v662 = vld [vmem:[%s661] sm:$0xff]
    %v663 = vld [vmem:[%s661 + $0x8] sm:$0xff]
    %v664 = vld [vmem:[%s661 + $0x10] sm:$0xff]
    %v665 = vld [vmem:[%s661 + $0x18] sm:$0xff]
    %666 = vmatpush.msra.mxu0 %v347
    %667 = vmatpush.msra.mxu0 %v343
    %668 = vmatpush.msra.mxu0 %v339
    %669 = vmatpush.msra.mxu0 %v335
    %670 = vmatpush.msra.mxu0 %v331
    %671 = vmatpush.msra.mxu0 %v327
    %672 = vmatpush.msra.mxu0 %v323
    %673 = vmatpush.msra.mxu0 %v319
    %674 = vmatpush.msra.mxu0 %v315
    %675 = vmatpush.msra.mxu0 %v311
    %676 = vmatpush.msra.mxu0 %v307
    %677 = vmatpush.msra.mxu0 %v303
    %678 = vmatpush.msra.mxu0 %v299
    %679 = vmatpush.msra.mxu0 %v295
    %680 = vmatpush.msra.mxu0 %v291
    %681 = vmatpush.msra.mxu0 %v287
    %682 = vmatmul.f32.gmra.mxu0 %v658
    %v683 = vpop.f32.mrf.mxu0
    %v684 = vadd.f32 0.0, %v683
    %685 = vdwg.mxu0
    %686 = vmatpush.msra.mxu0 %v348
    %687 = vmatpush.msra.mxu0 %v344
    %688 = vmatpush.msra.mxu0 %v340
    %689 = vmatpush.msra.mxu0 %v336
    %690 = vmatpush.msra.mxu0 %v332
    %691 = vmatpush.msra.mxu0 %v328
    %692 = vmatpush.msra.mxu0 %v324
    %693 = vmatpush.msra.mxu0 %v320
    %694 = vmatpush.msra.mxu0 %v316
    %695 = vmatpush.msra.mxu0 %v312
    %696 = vmatpush.msra.mxu0 %v308
    %697 = vmatpush.msra.mxu0 %v304
    %698 = vmatpush.msra.mxu0 %v300
    %699 = vmatpush.msra.mxu0 %v296
    %700 = vmatpush.msra.mxu0 %v292
    %701 = vmatpush.msra.mxu0 %v288
    %702 = vmatmul.f32.gmra.mxu0 %v658
    %v703 = vpop.f32.mrf.mxu0
    %v704 = vadd.f32 0.0, %v703
    %705 = vdwg.mxu0
    %706 = vmatpush.msra.mxu0 %v349
    %707 = vmatpush.msra.mxu0 %v345
    %708 = vmatpush.msra.mxu0 %v341
    %709 = vmatpush.msra.mxu0 %v337
    %710 = vmatpush.msra.mxu0 %v333
    %711 = vmatpush.msra.mxu0 %v329
    %712 = vmatpush.msra.mxu0 %v325
    %713 = vmatpush.msra.mxu0 %v321
    %714 = vmatpush.msra.mxu0 %v317
    %715 = vmatpush.msra.mxu0 %v313
    %716 = vmatpush.msra.mxu0 %v309
    %717 = vmatpush.msra.mxu0 %v305
    %718 = vmatpush.msra.mxu0 %v301
    %719 = vmatpush.msra.mxu0 %v297
    %720 = vmatpush.msra.mxu0 %v293
    %721 = vmatpush.msra.mxu0 %v289
    %722 = vmatmul.f32.gmra.mxu0 %v658
    %v723 = vpop.f32.mrf.mxu0
    %v724 = vadd.f32 0.0, %v723
    %725 = vdwg.mxu0
    %726 = vmatpush.msra.mxu0 %v350
    %727 = vmatpush.msra.mxu0 %v346
    %728 = vmatpush.msra.mxu0 %v342
    %729 = vmatpush.msra.mxu0 %v338
    %730 = vmatpush.msra.mxu0 %v334
    %731 = vmatpush.msra.mxu0 %v330
    %732 = vmatpush.msra.mxu0 %v326
    %733 = vmatpush.msra.mxu0 %v322
    %734 = vmatpush.msra.mxu0 %v318
    %735 = vmatpush.msra.mxu0 %v314
    %736 = vmatpush.msra.mxu0 %v310
    %737 = vmatpush.msra.mxu0 %v306
    %738 = vmatpush.msra.mxu0 %v302
    %739 = vmatpush.msra.mxu0 %v298
    %740 = vmatpush.msra.mxu0 %v294
    %741 = vmatpush.msra.mxu0 %v290
    %742 = vmatmul.f32.gmra.mxu0 %v658
    %v743 = vpop.f32.mrf.mxu0
    %v744 = vadd.f32 0.0, %v743
    %745 = vdwg.mxu0
    %v746 = vadd.f32 %v662, %v684
    %v747 = vadd.f32 %v663, %v704
    %v748 = vadd.f32 %v664, %v724
    %v749 = vadd.f32 %v665, %v744
    %v750 = vxor.u32 %v746, 2147483648
    %v751 = vmul.f32 %v750, 1.442695
    %v752 = vpow.pop %v751
    %v753 = vadd.f32 %v752, 1.0
    %v754 = vrcp.pop %v753
    %v755 = vmul.f32 %v753, %v754
    %v756 = vsub.f32 1.0, %v755
    %v757 = vmul.f32 %v754, %v756
    %v758 = vadd.f32 %v754, %v757
    %vm759 = vweird.f32 %v753
    %vm760 = vweird.f32 %v754
    %vm761 = vmor %vm759, %vm760
    %v762 = vsel %vm761, %v754, %v758
    %v763 = vand.u32 2147483647, %v753
    %vm764 = vcmp.eq.f32.partialorder %v763, 8.507059e+37
    %v765 = vand.u32 %v753, 2147483648
    %v766 = vor.u32 1.1754944e-38, %v765
    %v767 = vsel %vm764, %v766, %v762
    %v768 = vmul.f32 1.0, %v767
    %v769 = vxor.u32 %v747, 2147483648
    %v770 = vmul.f32 %v769, 1.442695
    %v771 = vpow.pop %v770
    %v772 = vadd.f32 %v771, 1.0
    %v773 = vrcp.pop %v772
    %v774 = vmul.f32 %v772, %v773
    %v775 = vsub.f32 1.0, %v774
    %v776 = vmul.f32 %v773, %v775
    %v777 = vadd.f32 %v773, %v776
    %vm778 = vweird.f32 %v772
    %vm779 = vweird.f32 %v773
    %vm780 = vmor %vm778, %vm779
    %v781 = vsel %vm780, %v773, %v777
    %v782 = vand.u32 2147483647, %v772
    %vm783 = vcmp.eq.f32.partialorder %v782, 8.507059e+37
    %v784 = vand.u32 %v772, 2147483648
    %v785 = vor.u32 1.1754944e-38, %v784
    %v786 = vsel %vm783, %v785, %v781
    %v787 = vmul.f32 1.0, %v786
    %v788 = vtanh.pop %v748
    %v789 = vxor.u32 %v749, 2147483648
    %v790 = vmul.f32 %v789, 1.442695
    %v791 = vpow.pop %v790
    %v792 = vadd.f32 %v791, 1.0
    %v793 = vrcp.pop %v792
    %v794 = vmul.f32 %v792, %v793
    %v795 = vsub.f32 1.0, %v794
    %v796 = vmul.f32 %v793, %v795
    %v797 = vadd.f32 %v793, %v796
    %vm798 = vweird.f32 %v792
    %vm799 = vweird.f32 %v793
    %vm800 = vmor %vm798, %vm799
    %v801 = vsel %vm800, %v793, %v797
    %v802 = vand.u32 2147483647, %v792
    %vm803 = vcmp.eq.f32.partialorder %v802, 8.507059e+37
    %v804 = vand.u32 %v792, 2147483648
    %v805 = vor.u32 1.1754944e-38, %v804
    %v806 = vsel %vm803, %v805, %v801
    %v807 = vmul.f32 1.0, %v806
    %v808 = vmul.f32 %v787, %v656
    %v809 = vmul.f32 %v768, %v788
    %v810 = vadd.f32 %v808, %v809
    %v811 = vtanh.pop %v810
    %v812 = vmul.f32 %v807, %v811
    %s813 = smul.u32 3, 4
    %s814 = smul.addr %s813, 8
    %s815 = scalar_lea.vmem [#allocation2], %s814
    %v816 = vld [vmem:[%s815] sm:$0xff]
    %v817 = vld [vmem:[%s815 + $0x8] sm:$0xff]
    %v818 = vld [vmem:[%s815 + $0x10] sm:$0xff]
    %v819 = vld [vmem:[%s815 + $0x18] sm:$0xff]
    %820 = vmatpush.msra.mxu0 %v347
    %821 = vmatpush.msra.mxu0 %v343
    %822 = vmatpush.msra.mxu0 %v339
    %823 = vmatpush.msra.mxu0 %v335
    %824 = vmatpush.msra.mxu0 %v331
    %825 = vmatpush.msra.mxu0 %v327
    %826 = vmatpush.msra.mxu0 %v323
    %827 = vmatpush.msra.mxu0 %v319
    %828 = vmatpush.msra.mxu0 %v315
    %829 = vmatpush.msra.mxu0 %v311
    %830 = vmatpush.msra.mxu0 %v307
    %831 = vmatpush.msra.mxu0 %v303
    %832 = vmatpush.msra.mxu0 %v299
    %833 = vmatpush.msra.mxu0 %v295
    %834 = vmatpush.msra.mxu0 %v291
    %835 = vmatpush.msra.mxu0 %v287
    %836 = vmatmul.f32.gmra.mxu0 %v812
    %v837 = vpop.f32.mrf.mxu0
    %v838 = vadd.f32 0.0, %v837
    %839 = vdwg.mxu0
    %840 = vmatpush.msra.mxu0 %v348
    %841 = vmatpush.msra.mxu0 %v344
    %842 = vmatpush.msra.mxu0 %v340
    %843 = vmatpush.msra.mxu0 %v336
    %844 = vmatpush.msra.mxu0 %v332
    %845 = vmatpush.msra.mxu0 %v328
    %846 = vmatpush.msra.mxu0 %v324
    %847 = vmatpush.msra.mxu0 %v320
    %848 = vmatpush.msra.mxu0 %v316
    %849 = vmatpush.msra.mxu0 %v312
    %850 = vmatpush.msra.mxu0 %v308
    %851 = vmatpush.msra.mxu0 %v304
    %852 = vmatpush.msra.mxu0 %v300
    %853 = vmatpush.msra.mxu0 %v296
    %854 = vmatpush.msra.mxu0 %v292
    %855 = vmatpush.msra.mxu0 %v288
    %856 = vmatmul.f32.gmra.mxu0 %v812
    %v857 = vpop.f32.mrf.mxu0
    %v858 = vadd.f32 0.0, %v857
    %859 = vdwg.mxu0
    %860 = vmatpush.msra.mxu0 %v349
    %861 = vmatpush.msra.mxu0 %v345
    %862 = vmatpush.msra.mxu0 %v341
    %863 = vmatpush.msra.mxu0 %v337
    %864 = vmatpush.msra.mxu0 %v333
    %865 = vmatpush.msra.mxu0 %v329
    %866 = vmatpush.msra.mxu0 %v325
    %867 = vmatpush.msra.mxu0 %v321
    %868 = vmatpush.msra.mxu0 %v317
    %869 = vmatpush.msra.mxu0 %v313
    %870 = vmatpush.msra.mxu0 %v309
    %871 = vmatpush.msra.mxu0 %v305
    %872 = vmatpush.msra.mxu0 %v301
    %873 = vmatpush.msra.mxu0 %v297
    %874 = vmatpush.msra.mxu0 %v293
    %875 = vmatpush.msra.mxu0 %v289
    %876 = vmatmul.f32.gmra.mxu0 %v812
    %v877 = vpop.f32.mrf.mxu0
    %v878 = vadd.f32 0.0, %v877
    %879 = vdwg.mxu0
    %880 = vmatpush.msra.mxu0 %v350
    %881 = vmatpush.msra.mxu0 %v346
    %882 = vmatpush.msra.mxu0 %v342
    %883 = vmatpush.msra.mxu0 %v338
    %884 = vmatpush.msra.mxu0 %v334
    %885 = vmatpush.msra.mxu0 %v330
    %886 = vmatpush.msra.mxu0 %v326
    %887 = vmatpush.msra.mxu0 %v322
    %888 = vmatpush.msra.mxu0 %v318
    %889 = vmatpush.msra.mxu0 %v314
    %890 = vmatpush.msra.mxu0 %v310
    %891 = vmatpush.msra.mxu0 %v306
    %892 = vmatpush.msra.mxu0 %v302
    %893 = vmatpush.msra.mxu0 %v298
    %894 = vmatpush.msra.mxu0 %v294
    %895 = vmatpush.msra.mxu0 %v290
    %896 = vmatmul.f32.gmra.mxu0 %v812
    %v897 = vpop.f32.mrf.mxu0
    %v898 = vadd.f32 0.0, %v897
    %899 = vdwg.mxu0
    %v900 = vadd.f32 %v816, %v838
    %v901 = vadd.f32 %v817, %v858
    %v902 = vadd.f32 %v818, %v878
    %v903 = vadd.f32 %v819, %v898
    %v904 = vxor.u32 %v900, 2147483648
    %v905 = vmul.f32 %v904, 1.442695
    %v906 = vpow.pop %v905
    %v907 = vadd.f32 %v906, 1.0
    %v908 = vrcp.pop %v907
    %v909 = vmul.f32 %v907, %v908
    %v910 = vsub.f32 1.0, %v909
    %v911 = vmul.f32 %v908, %v910
    %v912 = vadd.f32 %v908, %v911
    %vm913 = vweird.f32 %v907
    %vm914 = vweird.f32 %v908
    %vm915 = vmor %vm913, %vm914
    %v916 = vsel %vm915, %v908, %v912
    %v917 = vand.u32 2147483647, %v907
    %vm918 = vcmp.eq.f32.partialorder %v917, 8.507059e+37
    %v919 = vand.u32 %v907, 2147483648
    %v920 = vor.u32 1.1754944e-38, %v919
    %v921 = vsel %vm918, %v920, %v916
    %v922 = vmul.f32 1.0, %v921
    %v923 = vxor.u32 %v901, 2147483648
    %v924 = vmul.f32 %v923, 1.442695
    %v925 = vpow.pop %v924
    %v926 = vadd.f32 %v925, 1.0
    %v927 = vrcp.pop %v926
    %v928 = vmul.f32 %v926, %v927
    %v929 = vsub.f32 1.0, %v928
    %v930 = vmul.f32 %v927, %v929
    %v931 = vadd.f32 %v927, %v930
    %vm932 = vweird.f32 %v926
    %vm933 = vweird.f32 %v927
    %vm934 = vmor %vm932, %vm933
    %v935 = vsel %vm934, %v927, %v931
    %v936 = vand.u32 2147483647, %v926
    %vm937 = vcmp.eq.f32.partialorder %v936, 8.507059e+37
    %v938 = vand.u32 %v926, 2147483648
    %v939 = vor.u32 1.1754944e-38, %v938
    %v940 = vsel %vm937, %v939, %v935
    %v941 = vmul.f32 1.0, %v940
    %v942 = vtanh.pop %v902
    %v943 = vxor.u32 %v903, 2147483648
    %v944 = vmul.f32 %v943, 1.442695
    %v945 = vpow.pop %v944
    %v946 = vadd.f32 %v945, 1.0
    %v947 = vrcp.pop %v946
    %v948 = vmul.f32 %v946, %v947
    %v949 = vsub.f32 1.0, %v948
    %v950 = vmul.f32 %v947, %v949
    %v951 = vadd.f32 %v947, %v950
    %vm952 = vweird.f32 %v946
    %vm953 = vweird.f32 %v947
    %vm954 = vmor %vm952, %vm953
    %v955 = vsel %vm954, %v947, %v951
    %v956 = vand.u32 2147483647, %v946
    %vm957 = vcmp.eq.f32.partialorder %v956, 8.507059e+37
    %v958 = vand.u32 %v946, 2147483648
    %v959 = vor.u32 1.1754944e-38, %v958
    %v960 = vsel %vm957, %v959, %v955
    %v961 = vmul.f32 1.0, %v960
    %v962 = vmul.f32 %v941, %v810
    %v963 = vmul.f32 %v922, %v942
    %v964 = vadd.f32 %v962, %v963
    %v965 = vtanh.pop %v964
    %v966 = vmul.f32 %v961, %v965
    %s967 = smul.u32 4, 4
    %s968 = smul.addr %s967, 8
    %s969 = scalar_lea.vmem [#allocation2], %s968
    %v970 = vld [vmem:[%s969] sm:$0xff]
    %v971 = vld [vmem:[%s969 + $0x8] sm:$0xff]
    %v972 = vld [vmem:[%s969 + $0x10] sm:$0xff]
    %v973 = vld [vmem:[%s969 + $0x18] sm:$0xff]
    %974 = vmatpush.msra.mxu0 %v347
    %975 = vmatpush.msra.mxu0 %v343
    %976 = vmatpush.msra.mxu0 %v339
    %977 = vmatpush.msra.mxu0 %v335
    %978 = vmatpush.msra.mxu0 %v331
    %979 = vmatpush.msra.mxu0 %v327
    %980 = vmatpush.msra.mxu0 %v323
    %981 = vmatpush.msra.mxu0 %v319
    %982 = vmatpush.msra.mxu0 %v315
    %983 = vmatpush.msra.mxu0 %v311
    %984 = vmatpush.msra.mxu0 %v307
    %985 = vmatpush.msra.mxu0 %v303
    %986 = vmatpush.msra.mxu0 %v299
    %987 = vmatpush.msra.mxu0 %v295
    %988 = vmatpush.msra.mxu0 %v291
    %989 = vmatpush.msra.mxu0 %v287
    %990 = vmatmul.f32.gmra.mxu0 %v966
    %v991 = vpop.f32.mrf.mxu0
    %v992 = vadd.f32 0.0, %v991
    %993 = vdwg.mxu0
    %994 = vmatpush.msra.mxu0 %v348
    %995 = vmatpush.msra.mxu0 %v344
    %996 = vmatpush.msra.mxu0 %v340
    %997 = vmatpush.msra.mxu0 %v336
    %998 = vmatpush.msra.mxu0 %v332
    %999 = vmatpush.msra.mxu0 %v328
    %1000 = vmatpush.msra.mxu0 %v324
    %1001 = vmatpush.msra.mxu0 %v320
    %1002 = vmatpush.msra.mxu0 %v316
    %1003 = vmatpush.msra.mxu0 %v312
    %1004 = vmatpush.msra.mxu0 %v308
    %1005 = vmatpush.msra.mxu0 %v304
    %1006 = vmatpush.msra.mxu0 %v300
    %1007 = vmatpush.msra.mxu0 %v296
    %1008 = vmatpush.msra.mxu0 %v292
    %1009 = vmatpush.msra.mxu0 %v288
    %1010 = vmatmul.f32.gmra.mxu0 %v966
    %v1011 = vpop.f32.mrf.mxu0
    %v1012 = vadd.f32 0.0, %v1011
    %1013 = vdwg.mxu0
    %1014 = vmatpush.msra.mxu0 %v349
    %1015 = vmatpush.msra.mxu0 %v345
    %1016 = vmatpush.msra.mxu0 %v341
    %1017 = vmatpush.msra.mxu0 %v337
    %1018 = vmatpush.msra.mxu0 %v333
    %1019 = vmatpush.msra.mxu0 %v329
    %1020 = vmatpush.msra.mxu0 %v325
    %1021 = vmatpush.msra.mxu0 %v321
    %1022 = vmatpush.msra.mxu0 %v317
    %1023 = vmatpush.msra.mxu0 %v313
    %1024 = vmatpush.msra.mxu0 %v309
    %1025 = vmatpush.msra.mxu0 %v305
    %1026 = vmatpush.msra.mxu0 %v301
    %1027 = vmatpush.msra.mxu0 %v297
    %1028 = vmatpush.msra.mxu0 %v293
    %1029 = vmatpush.msra.mxu0 %v289
    %1030 = vmatmul.f32.gmra.mxu0 %v966
    %v1031 = vpop.f32.mrf.mxu0
    %v1032 = vadd.f32 0.0, %v1031
    %1033 = vdwg.mxu0
    %1034 = vmatpush.msra.mxu0 %v350
    %1035 = vmatpush.msra.mxu0 %v346
    %1036 = vmatpush.msra.mxu0 %v342
    %1037 = vmatpush.msra.mxu0 %v338
    %1038 = vmatpush.msra.mxu0 %v334
    %1039 = vmatpush.msra.mxu0 %v330
    %1040 = vmatpush.msra.mxu0 %v326
    %1041 = vmatpush.msra.mxu0 %v322
    %1042 = vmatpush.msra.mxu0 %v318
    %1043 = vmatpush.msra.mxu0 %v314
    %1044 = vmatpush.msra.mxu0 %v310
    %1045 = vmatpush.msra.mxu0 %v306
    %1046 = vmatpush.msra.mxu0 %v302
    %1047 = vmatpush.msra.mxu0 %v298
    %1048 = vmatpush.msra.mxu0 %v294
    %1049 = vmatpush.msra.mxu0 %v290
    %1050 = vmatmul.f32.gmra.mxu0 %v966
    %v1051 = vpop.f32.mrf.mxu0
    %v1052 = vadd.f32 0.0, %v1051
    %1053 = vdwg.mxu0
    %v1054 = vadd.f32 %v970, %v992
    %v1055 = vadd.f32 %v971, %v1012
    %v1056 = vadd.f32 %v972, %v1032
    %v1057 = vadd.f32 %v973, %v1052
    %v1058 = vxor.u32 %v1054, 2147483648
    %v1059 = vmul.f32 %v1058, 1.442695
    %v1060 = vpow.pop %v1059
    %v1061 = vadd.f32 %v1060, 1.0
    %v1062 = vrcp.pop %v1061
    %v1063 = vmul.f32 %v1061, %v1062
    %v1064 = vsub.f32 1.0, %v1063
    %v1065 = vmul.f32 %v1062, %v1064
    %v1066 = vadd.f32 %v1062, %v1065
    %vm1067 = vweird.f32 %v1061
    %vm1068 = vweird.f32 %v1062
    %vm1069 = vmor %vm1067, %vm1068
    %v1070 = vsel %vm1069, %v1062, %v1066
    %v1071 = vand.u32 2147483647, %v1061
    %vm1072 = vcmp.eq.f32.partialorder %v1071, 8.507059e+37
    %v1073 = vand.u32 %v1061, 2147483648
    %v1074 = vor.u32 1.1754944e-38, %v1073
    %v1075 = vsel %vm1072, %v1074, %v1070
    %v1076 = vmul.f32 1.0, %v1075
    %v1077 = vxor.u32 %v1055, 2147483648
    %v1078 = vmul.f32 %v1077, 1.442695
    %v1079 = vpow.pop %v1078
    %v1080 = vadd.f32 %v1079, 1.0
    %v1081 = vrcp.pop %v1080
    %v1082 = vmul.f32 %v1080, %v1081
    %v1083 = vsub.f32 1.0, %v1082
    %v1084 = vmul.f32 %v1081, %v1083
    %v1085 = vadd.f32 %v1081, %v1084
    %vm1086 = vweird.f32 %v1080
    %vm1087 = vweird.f32 %v1081
    %vm1088 = vmor %vm1086, %vm1087
    %v1089 = vsel %vm1088, %v1081, %v1085
    %v1090 = vand.u32 2147483647, %v1080
    %vm1091 = vcmp.eq.f32.partialorder %v1090, 8.507059e+37
    %v1092 = vand.u32 %v1080, 2147483648
    %v1093 = vor.u32 1.1754944e-38, %v1092
    %v1094 = vsel %vm1091, %v1093, %v1089
    %v1095 = vmul.f32 1.0, %v1094
    %v1096 = vtanh.pop %v1056
    %v1097 = vxor.u32 %v1057, 2147483648
    %v1098 = vmul.f32 %v1097, 1.442695
    %v1099 = vpow.pop %v1098
    %v1100 = vadd.f32 %v1099, 1.0
    %v1101 = vrcp.pop %v1100
    %v1102 = vmul.f32 %v1100, %v1101
    %v1103 = vsub.f32 1.0, %v1102
    %v1104 = vmul.f32 %v1101, %v1103
    %v1105 = vadd.f32 %v1101, %v1104
    %vm1106 = vweird.f32 %v1100
    %vm1107 = vweird.f32 %v1101
    %vm1108 = vmor %vm1106, %vm1107
    %v1109 = vsel %vm1108, %v1101, %v1105
    %v1110 = vand.u32 2147483647, %v1100
    %vm1111 = vcmp.eq.f32.partialorder %v1110, 8.507059e+37
    %v1112 = vand.u32 %v1100, 2147483648
    %v1113 = vor.u32 1.1754944e-38, %v1112
    %v1114 = vsel %vm1111, %v1113, %v1109
    %v1115 = vmul.f32 1.0, %v1114
    %v1116 = vmul.f32 %v1095, %v964
    %v1117 = vmul.f32 %v1076, %v1096
    %v1118 = vadd.f32 %v1116, %v1117
    %v1119 = vtanh.pop %v1118
    %v1120 = vmul.f32 %v1115, %v1119
    %s1121 = smul.u32 5, 4
    %s1122 = smul.addr %s1121, 8
    %s1123 = scalar_lea.vmem [#allocation2], %s1122
    %v1124 = vld [vmem:[%s1123] sm:$0xff]
    %v1125 = vld [vmem:[%s1123 + $0x8] sm:$0xff]
    %v1126 = vld [vmem:[%s1123 + $0x10] sm:$0xff]
    %v1127 = vld [vmem:[%s1123 + $0x18] sm:$0xff]
    %1128 = vmatpush.msra.mxu0 %v347
    %1129 = vmatpush.msra.mxu0 %v343
    %1130 = vmatpush.msra.mxu0 %v339
    %1131 = vmatpush.msra.mxu0 %v335
    %1132 = vmatpush.msra.mxu0 %v331
    %1133 = vmatpush.msra.mxu0 %v327
    %1134 = vmatpush.msra.mxu0 %v323
    %1135 = vmatpush.msra.mxu0 %v319
    %1136 = vmatpush.msra.mxu0 %v315
    %1137 = vmatpush.msra.mxu0 %v311
    %1138 = vmatpush.msra.mxu0 %v307
    %1139 = vmatpush.msra.mxu0 %v303
    %1140 = vmatpush.msra.mxu0 %v299
    %1141 = vmatpush.msra.mxu0 %v295
    %1142 = vmatpush.msra.mxu0 %v291
    %1143 = vmatpush.msra.mxu0 %v287
    %1144 = vmatmul.f32.gmra.mxu0 %v1120
    %v1145 = vpop.f32.mrf.mxu0
    %v1146 = vadd.f32 0.0, %v1145
    %1147 = vdwg.mxu0
    %1148 = vmatpush.msra.mxu0 %v348
    %1149 = vmatpush.msra.mxu0 %v344
    %1150 = vmatpush.msra.mxu0 %v340
    %1151 = vmatpush.msra.mxu0 %v336
    %1152 = vmatpush.msra.mxu0 %v332
    %1153 = vmatpush.msra.mxu0 %v328
    %1154 = vmatpush.msra.mxu0 %v324
    %1155 = vmatpush.msra.mxu0 %v320
    %1156 = vmatpush.msra.mxu0 %v316
    %1157 = vmatpush.msra.mxu0 %v312
    %1158 = vmatpush.msra.mxu0 %v308
    %1159 = vmatpush.msra.mxu0 %v304
    %1160 = vmatpush.msra.mxu0 %v300
    %1161 = vmatpush.msra.mxu0 %v296
    %1162 = vmatpush.msra.mxu0 %v292
    %1163 = vmatpush.msra.mxu0 %v288
    %1164 = vmatmul.f32.gmra.mxu0 %v1120
    %v1165 = vpop.f32.mrf.mxu0
    %v1166 = vadd.f32 0.0, %v1165
    %1167 = vdwg.mxu0
    %1168 = vmatpush.msra.mxu0 %v349
    %1169 = vmatpush.msra.mxu0 %v345
    %1170 = vmatpush.msra.mxu0 %v341
    %1171 = vmatpush.msra.mxu0 %v337
    %1172 = vmatpush.msra.mxu0 %v333
    %1173 = vmatpush.msra.mxu0 %v329
    %1174 = vmatpush.msra.mxu0 %v325
    %1175 = vmatpush.msra.mxu0 %v321
    %1176 = vmatpush.msra.mxu0 %v317
    %1177 = vmatpush.msra.mxu0 %v313
    %1178 = vmatpush.msra.mxu0 %v309
    %1179 = vmatpush.msra.mxu0 %v305
    %1180 = vmatpush.msra.mxu0 %v301
    %1181 = vmatpush.msra.mxu0 %v297
    %1182 = vmatpush.msra.mxu0 %v293
    %1183 = vmatpush.msra.mxu0 %v289
    %1184 = vmatmul.f32.gmra.mxu0 %v1120
    %v1185 = vpop.f32.mrf.mxu0
    %v1186 = vadd.f32 0.0, %v1185
    %1187 = vdwg.mxu0
    %1188 = vmatpush.msra.mxu0 %v350
    %1189 = vmatpush.msra.mxu0 %v346
    %1190 = vmatpush.msra.mxu0 %v342
    %1191 = vmatpush.msra.mxu0 %v338
    %1192 = vmatpush.msra.mxu0 %v334
    %1193 = vmatpush.msra.mxu0 %v330
    %1194 = vmatpush.msra.mxu0 %v326
    %1195 = vmatpush.msra.mxu0 %v322
    %1196 = vmatpush.msra.mxu0 %v318
    %1197 = vmatpush.msra.mxu0 %v314
    %1198 = vmatpush.msra.mxu0 %v310
    %1199 = vmatpush.msra.mxu0 %v306
    %1200 = vmatpush.msra.mxu0 %v302
    %1201 = vmatpush.msra.mxu0 %v298
    %1202 = vmatpush.msra.mxu0 %v294
    %1203 = vmatpush.msra.mxu0 %v290
    %1204 = vmatmul.f32.gmra.mxu0 %v1120
    %v1205 = vpop.f32.mrf.mxu0
    %v1206 = vadd.f32 0.0, %v1205
    %1207 = vdwg.mxu0
    %v1208 = vadd.f32 %v1124, %v1146
    %v1209 = vadd.f32 %v1125, %v1166
    %v1210 = vadd.f32 %v1126, %v1186
    %v1211 = vadd.f32 %v1127, %v1206
    %v1212 = vxor.u32 %v1208, 2147483648
    %v1213 = vmul.f32 %v1212, 1.442695
    %v1214 = vpow.pop %v1213
    %v1215 = vadd.f32 %v1214, 1.0
    %v1216 = vrcp.pop %v1215
    %v1217 = vmul.f32 %v1215, %v1216
    %v1218 = vsub.f32 1.0, %v1217
    %v1219 = vmul.f32 %v1216, %v1218
    %v1220 = vadd.f32 %v1216, %v1219
    %vm1221 = vweird.f32 %v1215
    %vm1222 = vweird.f32 %v1216
    %vm1223 = vmor %vm1221, %vm1222
    %v1224 = vsel %vm1223, %v1216, %v1220
    %v1225 = vand.u32 2147483647, %v1215
    %vm1226 = vcmp.eq.f32.partialorder %v1225, 8.507059e+37
    %v1227 = vand.u32 %v1215, 2147483648
    %v1228 = vor.u32 1.1754944e-38, %v1227
    %v1229 = vsel %vm1226, %v1228, %v1224
    %v1230 = vmul.f32 1.0, %v1229
    %v1231 = vxor.u32 %v1209, 2147483648
    %v1232 = vmul.f32 %v1231, 1.442695
    %v1233 = vpow.pop %v1232
    %v1234 = vadd.f32 %v1233, 1.0
    %v1235 = vrcp.pop %v1234
    %v1236 = vmul.f32 %v1234, %v1235
    %v1237 = vsub.f32 1.0, %v1236
    %v1238 = vmul.f32 %v1235, %v1237
    %v1239 = vadd.f32 %v1235, %v1238
    %vm1240 = vweird.f32 %v1234
    %vm1241 = vweird.f32 %v1235
    %vm1242 = vmor %vm1240, %vm1241
    %v1243 = vsel %vm1242, %v1235, %v1239
    %v1244 = vand.u32 2147483647, %v1234
    %vm1245 = vcmp.eq.f32.partialorder %v1244, 8.507059e+37
    %v1246 = vand.u32 %v1234, 2147483648
    %v1247 = vor.u32 1.1754944e-38, %v1246
    %v1248 = vsel %vm1245, %v1247, %v1243
    %v1249 = vmul.f32 1.0, %v1248
    %v1250 = vtanh.pop %v1210
    %v1251 = vxor.u32 %v1211, 2147483648
    %v1252 = vmul.f32 %v1251, 1.442695
    %v1253 = vpow.pop %v1252
    %v1254 = vadd.f32 %v1253, 1.0
    %v1255 = vrcp.pop %v1254
    %v1256 = vmul.f32 %v1254, %v1255
    %v1257 = vsub.f32 1.0, %v1256
    %v1258 = vmul.f32 %v1255, %v1257
    %v1259 = vadd.f32 %v1255, %v1258
    %vm1260 = vweird.f32 %v1254
    %vm1261 = vweird.f32 %v1255
    %vm1262 = vmor %vm1260, %vm1261
    %v1263 = vsel %vm1262, %v1255, %v1259
    %v1264 = vand.u32 2147483647, %v1254
    %vm1265 = vcmp.eq.f32.partialorder %v1264, 8.507059e+37
    %v1266 = vand.u32 %v1254, 2147483648
    %v1267 = vor.u32 1.1754944e-38, %v1266
    %v1268 = vsel %vm1265, %v1267, %v1263
    %v1269 = vmul.f32 1.0, %v1268
    %v1270 = vmul.f32 %v1249, %v1118
    %v1271 = vmul.f32 %v1230, %v1250
    %v1272 = vadd.f32 %v1270, %v1271
    %v1273 = vtanh.pop %v1272
    %v1274 = vmul.f32 %v1269, %v1273
    %s1275 = smul.u32 6, 4
    %s1276 = smul.addr %s1275, 8
    %s1277 = scalar_lea.vmem [#allocation2], %s1276
    %v1278 = vld [vmem:[%s1277] sm:$0xff]
    %v1279 = vld [vmem:[%s1277 + $0x8] sm:$0xff]
    %v1280 = vld [vmem:[%s1277 + $0x10] sm:$0xff]
    %v1281 = vld [vmem:[%s1277 + $0x18] sm:$0xff]
    %1282 = vmatpush.msra.mxu0 %v347
    %1283 = vmatpush.msra.mxu0 %v343
    %1284 = vmatpush.msra.mxu0 %v339
    %1285 = vmatpush.msra.mxu0 %v335
    %1286 = vmatpush.msra.mxu0 %v331
    %1287 = vmatpush.msra.mxu0 %v327
    %1288 = vmatpush.msra.mxu0 %v323
    %1289 = vmatpush.msra.mxu0 %v319
    %1290 = vmatpush.msra.mxu0 %v315
    %1291 = vmatpush.msra.mxu0 %v311
    %1292 = vmatpush.msra.mxu0 %v307
    %1293 = vmatpush.msra.mxu0 %v303
    %1294 = vmatpush.msra.mxu0 %v299
    %1295 = vmatpush.msra.mxu0 %v295
    %1296 = vmatpush.msra.mxu0 %v291
    %1297 = vmatpush.msra.mxu0 %v287
    %1298 = vmatmul.f32.gmra.mxu0 %v1274
    %v1299 = vpop.f32.mrf.mxu0
    %v1300 = vadd.f32 0.0, %v1299
    %1301 = vdwg.mxu0
    %1302 = vmatpush.msra.mxu0 %v348
    %1303 = vmatpush.msra.mxu0 %v344
    %1304 = vmatpush.msra.mxu0 %v340
    %1305 = vmatpush.msra.mxu0 %v336
    %1306 = vmatpush.msra.mxu0 %v332
    %1307 = vmatpush.msra.mxu0 %v328
    %1308 = vmatpush.msra.mxu0 %v324
    %1309 = vmatpush.msra.mxu0 %v320
    %1310 = vmatpush.msra.mxu0 %v316
    %1311 = vmatpush.msra.mxu0 %v312
    %1312 = vmatpush.msra.mxu0 %v308
    %1313 = vmatpush.msra.mxu0 %v304
    %1314 = vmatpush.msra.mxu0 %v300
    %1315 = vmatpush.msra.mxu0 %v296
    %1316 = vmatpush.msra.mxu0 %v292
    %1317 = vmatpush.msra.mxu0 %v288
    %1318 = vmatmul.f32.gmra.mxu0 %v1274
    %v1319 = vpop.f32.mrf.mxu0
    %v1320 = vadd.f32 0.0, %v1319
    %1321 = vdwg.mxu0
    %1322 = vmatpush.msra.mxu0 %v349
    %1323 = vmatpush.msra.mxu0 %v345
    %1324 = vmatpush.msra.mxu0 %v341
    %1325 = vmatpush.msra.mxu0 %v337
    %1326 = vmatpush.msra.mxu0 %v333
    %1327 = vmatpush.msra.mxu0 %v329
    %1328 = vmatpush.msra.mxu0 %v325
    %1329 = vmatpush.msra.mxu0 %v321
    %1330 = vmatpush.msra.mxu0 %v317
    %1331 = vmatpush.msra.mxu0 %v313
    %1332 = vmatpush.msra.mxu0 %v309
    %1333 = vmatpush.msra.mxu0 %v305
    %1334 = vmatpush.msra.mxu0 %v301
    %1335 = vmatpush.msra.mxu0 %v297
    %1336 = vmatpush.msra.mxu0 %v293
    %1337 = vmatpush.msra.mxu0 %v289
    %1338 = vmatmul.f32.gmra.mxu0 %v1274
    %v1339 = vpop.f32.mrf.mxu0
    %v1340 = vadd.f32 0.0, %v1339
    %1341 = vdwg.mxu0
    %1342 = vmatpush.msra.mxu0 %v350
    %1343 = vmatpush.msra.mxu0 %v346
    %1344 = vmatpush.msra.mxu0 %v342
    %1345 = vmatpush.msra.mxu0 %v338
    %1346 = vmatpush.msra.mxu0 %v334
    %1347 = vmatpush.msra.mxu0 %v330
    %1348 = vmatpush.msra.mxu0 %v326
    %1349 = vmatpush.msra.mxu0 %v322
    %1350 = vmatpush.msra.mxu0 %v318
    %1351 = vmatpush.msra.mxu0 %v314
    %1352 = vmatpush.msra.mxu0 %v310
    %1353 = vmatpush.msra.mxu0 %v306
    %1354 = vmatpush.msra.mxu0 %v302
    %1355 = vmatpush.msra.mxu0 %v298
    %1356 = vmatpush.msra.mxu0 %v294
    %1357 = vmatpush.msra.mxu0 %v290
    %1358 = vmatmul.f32.gmra.mxu0 %v1274
    %v1359 = vpop.f32.mrf.mxu0
    %v1360 = vadd.f32 0.0, %v1359
    %1361 = vdwg.mxu0
    %v1362 = vadd.f32 %v1278, %v1300
    %v1363 = vadd.f32 %v1279, %v1320
    %v1364 = vadd.f32 %v1280, %v1340
    %v1365 = vadd.f32 %v1281, %v1360
    %v1366 = vxor.u32 %v1362, 2147483648
    %v1367 = vmul.f32 %v1366, 1.442695
    %v1368 = vpow.pop %v1367
    %v1369 = vadd.f32 %v1368, 1.0
    %v1370 = vrcp.pop %v1369
    %v1371 = vmul.f32 %v1369, %v1370
    %v1372 = vsub.f32 1.0, %v1371
    %v1373 = vmul.f32 %v1370, %v1372
    %v1374 = vadd.f32 %v1370, %v1373
    %vm1375 = vweird.f32 %v1369
    %vm1376 = vweird.f32 %v1370
    %vm1377 = vmor %vm1375, %vm1376
    %v1378 = vsel %vm1377, %v1370, %v1374
    %v1379 = vand.u32 2147483647, %v1369
    %vm1380 = vcmp.eq.f32.partialorder %v1379, 8.507059e+37
    %v1381 = vand.u32 %v1369, 2147483648
    %v1382 = vor.u32 1.1754944e-38, %v1381
    %v1383 = vsel %vm1380, %v1382, %v1378
    %v1384 = vmul.f32 1.0, %v1383
    %v1385 = vxor.u32 %v1363, 2147483648
    %v1386 = vmul.f32 %v1385, 1.442695
    %v1387 = vpow.pop %v1386
    %v1388 = vadd.f32 %v1387, 1.0
    %v1389 = vrcp.pop %v1388
    %v1390 = vmul.f32 %v1388, %v1389
    %v1391 = vsub.f32 1.0, %v1390
    %v1392 = vmul.f32 %v1389, %v1391
    %v1393 = vadd.f32 %v1389, %v1392
    %vm1394 = vweird.f32 %v1388
    %vm1395 = vweird.f32 %v1389
    %vm1396 = vmor %vm1394, %vm1395
    %v1397 = vsel %vm1396, %v1389, %v1393
    %v1398 = vand.u32 2147483647, %v1388
    %vm1399 = vcmp.eq.f32.partialorder %v1398, 8.507059e+37
    %v1400 = vand.u32 %v1388, 2147483648
    %v1401 = vor.u32 1.1754944e-38, %v1400
    %v1402 = vsel %vm1399, %v1401, %v1397
    %v1403 = vmul.f32 1.0, %v1402
    %v1404 = vtanh.pop %v1364
    %v1405 = vxor.u32 %v1365, 2147483648
    %v1406 = vmul.f32 %v1405, 1.442695
    %v1407 = vpow.pop %v1406
    %v1408 = vadd.f32 %v1407, 1.0
    %v1409 = vrcp.pop %v1408
    %v1410 = vmul.f32 %v1408, %v1409
    %v1411 = vsub.f32 1.0, %v1410
    %v1412 = vmul.f32 %v1409, %v1411
    %v1413 = vadd.f32 %v1409, %v1412
    %vm1414 = vweird.f32 %v1408
    %vm1415 = vweird.f32 %v1409
    %vm1416 = vmor %vm1414, %vm1415
    %v1417 = vsel %vm1416, %v1409, %v1413
    %v1418 = vand.u32 2147483647, %v1408
    %vm1419 = vcmp.eq.f32.partialorder %v1418, 8.507059e+37
    %v1420 = vand.u32 %v1408, 2147483648
    %v1421 = vor.u32 1.1754944e-38, %v1420
    %v1422 = vsel %vm1419, %v1421, %v1417
    %v1423 = vmul.f32 1.0, %v1422
    %v1424 = vmul.f32 %v1403, %v1272
    %v1425 = vmul.f32 %v1384, %v1404
    %v1426 = vadd.f32 %v1424, %v1425
    %v1427 = vtanh.pop %v1426
    %v1428 = vmul.f32 %v1423, %v1427
    %s1429 = smul.u32 7, 4
    %s1430 = smul.addr %s1429, 8
    %s1431 = scalar_lea.vmem [#allocation2], %s1430
    %v1432 = vld [vmem:[%s1431] sm:$0xff]
    %v1433 = vld [vmem:[%s1431 + $0x8] sm:$0xff]
    %v1434 = vld [vmem:[%s1431 + $0x10] sm:$0xff]
    %v1435 = vld [vmem:[%s1431 + $0x18] sm:$0xff]
    %1436 = vmatpush.msra.mxu0 %v347
    %1437 = vmatpush.msra.mxu0 %v343
    %1438 = vmatpush.msra.mxu0 %v339
    %1439 = vmatpush.msra.mxu0 %v335
    %1440 = vmatpush.msra.mxu0 %v331
    %1441 = vmatpush.msra.mxu0 %v327
    %1442 = vmatpush.msra.mxu0 %v323
    %1443 = vmatpush.msra.mxu0 %v319
    %1444 = vmatpush.msra.mxu0 %v315
    %1445 = vmatpush.msra.mxu0 %v311
    %1446 = vmatpush.msra.mxu0 %v307
    %1447 = vmatpush.msra.mxu0 %v303
    %1448 = vmatpush.msra.mxu0 %v299
    %1449 = vmatpush.msra.mxu0 %v295
    %1450 = vmatpush.msra.mxu0 %v291
    %1451 = vmatpush.msra.mxu0 %v287
    %1452 = vmatmul.f32.gmra.mxu0 %v1428
    %v1453 = vpop.f32.mrf.mxu0
    %v1454 = vadd.f32 0.0, %v1453
    %1455 = vdwg.mxu0
    %1456 = vmatpush.msra.mxu0 %v348
    %1457 = vmatpush.msra.mxu0 %v344
    %1458 = vmatpush.msra.mxu0 %v340
    %1459 = vmatpush.msra.mxu0 %v336
    %1460 = vmatpush.msra.mxu0 %v332
    %1461 = vmatpush.msra.mxu0 %v328
    %1462 = vmatpush.msra.mxu0 %v324
    %1463 = vmatpush.msra.mxu0 %v320
    %1464 = vmatpush.msra.mxu0 %v316
    %1465 = vmatpush.msra.mxu0 %v312
    %1466 = vmatpush.msra.mxu0 %v308
    %1467 = vmatpush.msra.mxu0 %v304
    %1468 = vmatpush.msra.mxu0 %v300
    %1469 = vmatpush.msra.mxu0 %v296
    %1470 = vmatpush.msra.mxu0 %v292
    %1471 = vmatpush.msra.mxu0 %v288
    %1472 = vmatmul.f32.gmra.mxu0 %v1428
    %v1473 = vpop.f32.mrf.mxu0
    %v1474 = vadd.f32 0.0, %v1473
    %1475 = vdwg.mxu0
    %1476 = vmatpush.msra.mxu0 %v349
    %1477 = vmatpush.msra.mxu0 %v345
    %1478 = vmatpush.msra.mxu0 %v341
    %1479 = vmatpush.msra.mxu0 %v337
    %1480 = vmatpush.msra.mxu0 %v333
    %1481 = vmatpush.msra.mxu0 %v329
    %1482 = vmatpush.msra.mxu0 %v325
    %1483 = vmatpush.msra.mxu0 %v321
    %1484 = vmatpush.msra.mxu0 %v317
    %1485 = vmatpush.msra.mxu0 %v313
    %1486 = vmatpush.msra.mxu0 %v309
    %1487 = vmatpush.msra.mxu0 %v305
    %1488 = vmatpush.msra.mxu0 %v301
    %1489 = vmatpush.msra.mxu0 %v297
    %1490 = vmatpush.msra.mxu0 %v293
    %1491 = vmatpush.msra.mxu0 %v289
    %1492 = vmatmul.f32.gmra.mxu0 %v1428
    %v1493 = vpop.f32.mrf.mxu0
    %v1494 = vadd.f32 0.0, %v1493
    %1495 = vdwg.mxu0
    %1496 = vmatpush.msra.mxu0 %v350
    %1497 = vmatpush.msra.mxu0 %v346
    %1498 = vmatpush.msra.mxu0 %v342
    %1499 = vmatpush.msra.mxu0 %v338
    %1500 = vmatpush.msra.mxu0 %v334
    %1501 = vmatpush.msra.mxu0 %v330
    %1502 = vmatpush.msra.mxu0 %v326
    %1503 = vmatpush.msra.mxu0 %v322
    %1504 = vmatpush.msra.mxu0 %v318
    %1505 = vmatpush.msra.mxu0 %v314
    %1506 = vmatpush.msra.mxu0 %v310
    %1507 = vmatpush.msra.mxu0 %v306
    %1508 = vmatpush.msra.mxu0 %v302
    %1509 = vmatpush.msra.mxu0 %v298
    %1510 = vmatpush.msra.mxu0 %v294
    %1511 = vmatpush.msra.mxu0 %v290
    %1512 = vmatmul.f32.gmra.mxu0 %v1428
    %v1513 = vpop.f32.mrf.mxu0
    %v1514 = vadd.f32 0.0, %v1513
    %1515 = vdwg.mxu0
    %v1516 = vadd.f32 %v1432, %v1454
    %v1517 = vadd.f32 %v1433, %v1474
    %v1518 = vadd.f32 %v1434, %v1494
    %v1519 = vadd.f32 %v1435, %v1514
    %v1520 = vxor.u32 %v1516, 2147483648
    %v1521 = vmul.f32 %v1520, 1.442695
    %v1522 = vpow.pop %v1521
    %v1523 = vadd.f32 %v1522, 1.0
    %v1524 = vrcp.pop %v1523
    %v1525 = vmul.f32 %v1523, %v1524
    %v1526 = vsub.f32 1.0, %v1525
    %v1527 = vmul.f32 %v1524, %v1526
    %v1528 = vadd.f32 %v1524, %v1527
    %vm1529 = vweird.f32 %v1523
    %vm1530 = vweird.f32 %v1524
    %vm1531 = vmor %vm1529, %vm1530
    %v1532 = vsel %vm1531, %v1524, %v1528
    %v1533 = vand.u32 2147483647, %v1523
    %vm1534 = vcmp.eq.f32.partialorder %v1533, 8.507059e+37
    %v1535 = vand.u32 %v1523, 2147483648
    %v1536 = vor.u32 1.1754944e-38, %v1535
    %v1537 = vsel %vm1534, %v1536, %v1532
    %v1538 = vmul.f32 1.0, %v1537
    %v1539 = vxor.u32 %v1517, 2147483648
    %v1540 = vmul.f32 %v1539, 1.442695
    %v1541 = vpow.pop %v1540
    %v1542 = vadd.f32 %v1541, 1.0
    %v1543 = vrcp.pop %v1542
    %v1544 = vmul.f32 %v1542, %v1543
    %v1545 = vsub.f32 1.0, %v1544
    %v1546 = vmul.f32 %v1543, %v1545
    %v1547 = vadd.f32 %v1543, %v1546
    %vm1548 = vweird.f32 %v1542
    %vm1549 = vweird.f32 %v1543
    %vm1550 = vmor %vm1548, %vm1549
    %v1551 = vsel %vm1550, %v1543, %v1547
    %v1552 = vand.u32 2147483647, %v1542
    %vm1553 = vcmp.eq.f32.partialorder %v1552, 8.507059e+37
    %v1554 = vand.u32 %v1542, 2147483648
    %v1555 = vor.u32 1.1754944e-38, %v1554
    %v1556 = vsel %vm1553, %v1555, %v1551
    %v1557 = vmul.f32 1.0, %v1556
    %v1558 = vtanh.pop %v1518
    %v1559 = vxor.u32 %v1519, 2147483648
    %v1560 = vmul.f32 %v1559, 1.442695
    %v1561 = vpow.pop %v1560
    %v1562 = vadd.f32 %v1561, 1.0
    %v1563 = vrcp.pop %v1562
    %v1564 = vmul.f32 %v1562, %v1563
    %v1565 = vsub.f32 1.0, %v1564
    %v1566 = vmul.f32 %v1563, %v1565
    %v1567 = vadd.f32 %v1563, %v1566
    %vm1568 = vweird.f32 %v1562
    %vm1569 = vweird.f32 %v1563
    %vm1570 = vmor %vm1568, %vm1569
    %v1571 = vsel %vm1570, %v1563, %v1567
    %v1572 = vand.u32 2147483647, %v1562
    %vm1573 = vcmp.eq.f32.partialorder %v1572, 8.507059e+37
    %v1574 = vand.u32 %v1562, 2147483648
    %v1575 = vor.u32 1.1754944e-38, %v1574
    %v1576 = vsel %vm1573, %v1575, %v1571
    %v1577 = vmul.f32 1.0, %v1576
    %v1578 = vmul.f32 %v1557, %v1426
    %v1579 = vmul.f32 %v1538, %v1558
    %v1580 = vadd.f32 %v1578, %v1579
    %v1581 = vtanh.pop %v1580
    %v1582 = vmul.f32 %v1577, %v1581
    %v1583 = vld [vmem:[%s4] sm:$0xff]
    %v1584 = vld [vmem:[%s4 + $0x8] sm:$0xff]
    %v1585 = vld [vmem:[%s4 + $0x10] sm:$0xff]
    %v1586 = vld [vmem:[%s4 + $0x18] sm:$0xff]
    %v1587 = vld [vmem:[%s4 + $0x20] sm:$0xff]
    %v1588 = vld [vmem:[%s4 + $0x28] sm:$0xff]
    %v1589 = vld [vmem:[%s4 + $0x30] sm:$0xff]
    %v1590 = vld [vmem:[%s4 + $0x38] sm:$0xff]
    %v1591 = vld [vmem:[%s4 + $0x40] sm:$0xff]
    %v1592 = vld [vmem:[%s4 + $0x48] sm:$0xff]
    %v1593 = vld [vmem:[%s4 + $0x50] sm:$0xff]
    %v1594 = vld [vmem:[%s4 + $0x58] sm:$0xff]
    %v1595 = vld [vmem:[%s4 + $0x60] sm:$0xff]
    %v1596 = vld [vmem:[%s4 + $0x68] sm:$0xff]
    %v1597 = vld [vmem:[%s4 + $0x70] sm:$0xff]
    %v1598 = vld [vmem:[%s4 + $0x78] sm:$0xff]
    %v1599 = vld [vmem:[%s5] sm:$0x1]
    %v1601 = vperm.slane %v1599, 0
    %1603 = vmatpush.msra.mxu0 %v1598
    %1604 = vmatpush.msra.mxu0 %v1597
    %1605 = vmatpush.msra.mxu0 %v1596
    %1606 = vmatpush.msra.mxu0 %v1595
    %1607 = vmatpush.msra.mxu0 %v1594
    %1608 = vmatpush.msra.mxu0 %v1593
    %1609 = vmatpush.msra.mxu0 %v1592
    %1610 = vmatpush.msra.mxu0 %v1591
    %1611 = vmatpush.msra.mxu0 %v1590
    %1612 = vmatpush.msra.mxu0 %v1589
    %1613 = vmatpush.msra.mxu0 %v1588
    %1614 = vmatpush.msra.mxu0 %v1587
    %1615 = vmatpush.msra.mxu0 %v1586
    %1616 = vmatpush.msra.mxu0 %v1585
    %1617 = vmatpush.msra.mxu0 %v1584
    %1618 = vmatpush.msra.mxu0 %v1583
    %1619 = vmatmul.f32.gmra.mxu0 %v1582
    %v1620 = vpop.f32.mrf.mxu0
    %v1621 = vadd.f32 %v1601, %v1620
    %1622 = vdwg.mxu0
    %vm1623 = vcmask 39936
    %1624 = vst.msk [vmem:[#allocation6] sm:$0xff] %vm1623, %v1621
    // Predicated region
    $region30: #{tpu_custom_call.1} parent=1 // pred_check
      _
    $region31: #{tpu_custom_call.1} parent=1 // pred_check_branch
      %1626 = sbr.rel (0) target = $region33
    $region32: #{tpu_custom_call.1} parent=1 // pred_region
      %1628 = vsyncadd [#allocation5], 0
      %s1630 = sshll.u32 [#allocation6], 4
      %s1631 = int_to_ptr.vmem [resolvable:$true] %s1630
      %s1632 = sshll.u32 %s6, 4
      %s1633 = int_to_ptr.hbm [resolvable:$true] %s1632
      %1635 = dma.vmem_to_hbm [thread:$0]  %s1631, 128, %s1633, [#allocation5]
    $region33: #{tpu_custom_call.1} parent=1 // pred_fallthru
      _
    // Predicated region
    $region34: #{tpu_custom_call.1} parent=1 // pred_check
      _
    $region35: #{tpu_custom_call.1} parent=1 // pred_check_branch
      %1637 = sbr.rel (0) target = $region37
    $region36: #{tpu_custom_call.1} parent=1 // pred_region
      %1639 = dma.done [#allocation5], 128
    $region37: #{tpu_custom_call.1} parent=1 // pred_fallthru
      _
    %1640 = vsyncpa [#allocation4], 1
    %1641 = vsyncpa [#allocation5], 1

</llo_original>
